<compile_context>
chip_gen: v5e
topology: v5e:2x2
jax: 0.10.0
libtpu: 0.0.40
codegen_flags: <defaults>
</compile_context>

<pallas_src>
import jax
import jax.numpy as jnp
from jax.experimental import pallas as pl
from jax.experimental.pallas import tpu as pltpu


# ----------------------------- small helpers --------------------------------

def _rup(x, m):
    return ((x + m - 1) // m) * m


def _pad2(x, rows, cols):
    return jnp.pad(x, ((0, rows - x.shape[0]), (0, cols - x.shape[1])))


def _nbytes(*arrays):
    return sum(int(a.size) * a.dtype.itemsize for a in arrays)


def _vmem_limit(nbytes):
    # 4x headroom for double-buffering / compiler scratch, floored at the
    # known-safe 32 MiB default, clamped to 60 MiB so the request stays valid
    # on v7x (64 MiB physical VMEM per TensorCore).
    return int(min(max(4 * nbytes, 32 * 1024 * 1024), 60 * 1024 * 1024))


# ------------------------- kernel 1: med SMILES MLP --------------------------
# Computes med_rep.T = (Linear(ReLU(Linear(ReLU(med_init)))))^T with the
# feature dim on sublanes and M on lanes.  Depends only on params, so it runs
# exactly once inside prepare_params and its output is reused every forward.

def _med_mlp_kernel(x_ref, wm1t_ref, bm1t_ref, wm2t_ref, bm2t_ref, out_ref):
    # x_ref already holds relu(med_init).T in bf16 (the leading ReLU is folded
    # into the f32 wrapper pass: no bf16 element-wise work on v5e's VPU).
    h = jnp.dot(wm1t_ref[...], x_ref[...], preferred_element_type=jnp.float32)
    h = jnp.maximum(h + bm1t_ref[...], 0).astype(jnp.bfloat16)
    r = jnp.dot(wm2t_ref[...], h, preferred_element_type=jnp.float32)
    out_ref[...] = (r + bm2t_ref[...]).astype(out_ref.dtype)


def compute_med_rep_t(params):
    """med_rep transposed: (Dp, Mp) bf16, M on lanes.  Params-only -> run once."""
    M, S = params["med_init"].shape
    D = params["wm2"].shape[0]
    Dp, Mp = _rup(D, 128), _rup(M, 128)

    med_t = _pad2(jax.nn.relu(params["med_init"]), Mp, S).T.astype(jnp.bfloat16)
    wm1_t = _pad2(params["wm1"], S, Dp).T.astype(jnp.bfloat16)        # (Dp, S)
    wm2_t = _pad2(params["wm2"], Dp, Dp).T.astype(jnp.bfloat16)       # (Dp, Dp)
    bm1_t = _pad2(params["bm1"].reshape(-1, 1), Dp, 1)                # (Dp, 1) f32
    bm2_t = _pad2(params["bm2"].reshape(-1, 1), Dp, 1)                # (Dp, 1) f32

    flops = 2 * Mp * S * Dp + 2 * Mp * Dp * Dp
    bytes_accessed = _nbytes(med_t, wm1_t, wm2_t, bm1_t, bm2_t) + Dp * Mp * 2
    common = dict(
        out_shape=jax.ShapeDtypeStruct((Dp, Mp), jnp.bfloat16),
        cost_estimate=pl.CostEstimate(
            flops=flops, transcendentals=0, bytes_accessed=bytes_accessed),
    )

    if Mp <= 512:
        # Small M: everything fits in a few hundred KiB of VMEM; grid steps
        # would only add per-step overhead -> single block, no grid.
        vmem = pl.BlockSpec(memory_space=pltpu.MemorySpace.VMEM)
        return pl.pallas_call(
            _med_mlp_kernel,
            in_specs=[vmem] * 5,
            out_specs=vmem,
            compiler_params=pltpu.CompilerParams(
                vmem_limit_bytes=_vmem_limit(bytes_accessed)),
            **common,
        )(med_t, wm1_t, bm1_t, wm2_t, bm2_t)

    # Large M: stream med_init.T in wide lane tiles (>=256 matches the 2x256^2
    # MXU of v6e/v7x) so its DMA pipelines against MXU work; resident weights
    # are single-buffered to save VMEM (constant index_map -> no benefit from
    # double-buffering).
    tile_m = 512 if Mp % 512 == 0 else (256 if Mp % 256 == 0 else 128)

    def _resident(shape):
        return pl.BlockSpec(shape, lambda j: (0, 0), pipeline_mode=pl.Buffered(1))

    return pl.pallas_call(
        _med_mlp_kernel,
        grid=(Mp // tile_m,),
        in_specs=[
            pl.BlockSpec((S, tile_m), lambda j: (0, j)),   # pipelined M tiles
            _resident((Dp, S)),
            _resident((Dp, 1)),
            _resident((Dp, Dp)),
            _resident((Dp, 1)),
        ],
        out_specs=pl.BlockSpec((Dp, tile_m), lambda j: (0, j)),
        compiler_params=pltpu.CompilerParams(
            dimension_semantics=("parallel",),             # megacore on v7x
            vmem_limit_bytes=_vmem_limit(bytes_accessed)),
        **common,
    )(med_t, wm1_t, bm1_t, wm2_t, bm2_t)


# --------------------- one-time parameter preparation ------------------------

def prepare_params(params):
    """Pad/cast all weights to (8,128)-friendly bf16 blocks, pad ddi, and run
    the params-only med MLP kernel.  Call once; reuse the result every forward."""
    D = params["wlin"].shape[0]
    M = params["ddi"].shape[0]
    Dp, Mp = _rup(D, 128), _rup(M, 128)
    bf16 = jnp.bfloat16
    pad_w = lambda w: _pad2(w, Dp, Dp).astype(bf16)
    pad_b = lambda b: _pad2(b.reshape(1, -1), 1, Dp)       # f32
    return {
        "wd": jnp.concatenate([pad_w(params["wd"][:D]),
                               pad_w(params["wd"][D:])], axis=0),
        "wp": jnp.concatenate([pad_w(params["wp"][:D]),
                               pad_w(params["wp"][D:])], axis=0),
        "wq": jnp.concatenate([pad_w(params["wq"][:D]),
                               pad_w(params["wq"][D:2 * D]),
                               pad_w(params["wq"][2 * D:])], axis=0),
        "wlin": pad_w(params["wlin"]),
        "bd": pad_b(params["bd"]), "bp": pad_b(params["bp"]),
        "blin": pad_b(params["blin"]), "bq": pad_b(params["bq"]),
        "ddi": _pad2(params["ddi"], Mp, Mp).astype(bf16),   # 0/1 exact in bf16
        "med_rep_t": compute_med_rep_t(params),             # (Dp, Mp) bf16
    }


# --------------------------- kernel 2: CCLNet head ---------------------------

def _make_head_kernel(t_real, m_real):
    bf16 = jnp.bfloat16

    def head_kernel(dp_ref, pp_ref, s_ref,
                    wd_ref, bd_ref, wp_ref, bp_ref,
                    wlin_ref, blin_ref, wq_ref, bq_ref,
                    med_t_ref, ddi_hbm_ref,
                    result_ref, bn_ref,
                    ddi_vmem, ddi_sem):
        # ddi is only needed for the final quadratic form: kick off its
        # HBM->VMEM copy now and hide it behind the MLP/query matmul chain.
        ddi_cp = pltpu.make_async_copy(ddi_hbm_ref, ddi_vmem, ddi_sem)
        ddi_cp.start()

        relu = lambda x: jnp.maximum(x, 0)
        mm = lambda a, b: jnp.dot(a, b, preferred_element_type=jnp.float32)
        Dp = wq_ref.shape[1]

        # sym_d / sym_p : Linear(2D -> D); leading ReLU was folded into the f32
        # wrapper (relu commutes with padding and the bf16 cast), inputs are
        # pre-concatenated so each is ONE K=2*Dp bf16 matmul with f32 accum.
        diag_rep = mm(dp_ref[...], wd_ref[...]) + bd_ref[...]
        pro_rep = mm(pp_ref[...], wp_ref[...]) + bp_ref[...]

        # lin : ReLU -> Linear(D -> D), shared across the three sequences.
        wlin = wlin_ref[...]
        blin = blin_ref[...]
        diag_seq = mm(relu(diag_rep).astype(bf16), wlin) + blin
        pro_seq = mm(relu(pro_rep).astype(bf16), wlin) + blin
        sym_seq = mm(s_ref[...], wlin) + blin          # s_ref is already relu(sym)

        # query : ReLU -> Linear(3D -> D) as three accumulated (Dp,Dp) matmuls
        # on static wq slices (no (Tp,3Dp) concat temp; each partial issues as
        # soon as its relu(x_seq) operand is ready).
        q = mm(relu(diag_seq).astype(bf16), wq_ref[0:Dp, :])
        q += mm(relu(pro_seq).astype(bf16), wq_ref[Dp:2 * Dp, :])
        q += mm(relu(sym_seq).astype(bf16), wq_ref[2 * Dp:3 * Dp, :])
        query = q + bq_ref[...]

        # result = query @ med_rep.T ; med_rep is pre-transposed (D on sublanes,
        # M on lanes) -> plain lane-dense (T,D)@(D,M) matmul and f32 stores.
        result = mm(query.astype(bf16), med_t_ref[...])
        result_ref[...] = result

        # batch_neg = (1/(M*T)) * sum_n( p_n @ ddi @ p_n ), p = sigmoid(result).
        # Mask BOTH padded visit rows and padded medication columns explicitly
        # so batch_neg never depends on the contents of the padded region.
        p = jax.nn.sigmoid(result)
        row = jax.lax.broadcasted_iota(jnp.int32, p.shape, 0)
        col = jax.lax.broadcasted_iota(jnp.int32, p.shape, 1)
        p = jnp.where((row < t_real) & (col < m_real), p, 0.0)

        ddi_cp.wait()                                   # ddi now in VMEM scratch
        pd = mm(p.astype(bf16), ddi_vmem[...])          # (Tp, Mp) f32
        total = jnp.sum(pd * p)
        # TODO(synk): review suggested an SMEM scalar output; Mosaic vreg->sreg
        # moves of vector-reduction results are not reliably lowerable, so the
        # scalar stays a single (1,1) VMEM writeback (4 bytes).
        bn_ref[...] = jnp.reshape(total * (1.0 / (m_real * t_real)), (1, 1))

    return head_kernel


def cclnet_head(inputs, packed, *, d_real, m_real):
    T, D = inputs["diag_cls"].shape
    assert D == d_real
    Dp = packed["wlin"].shape[0]
    Mp = packed["ddi"].shape[0]
    Tp = _rup(T, 8)

    bf16 = jnp.bfloat16
    # ReLU applied in f32 *before* the bf16 cast (relu commutes with pad/cast);
    # keeps bf16 element-wise work off v5e's f32-only VPU.
    pad_act = lambda x: _pad2(jax.nn.relu(x), Tp, Dp).astype(bf16)
    diag_p = pad_act(inputs["diag_cls"])
    pro_p = pad_act(inputs["pro_cls"])
    sym_p = pad_act(inputs["sym_cls"])
    # Pre-concatenate [x, sym] padded blocks so each concat-Linear is 1 matmul.
    dp_in = jnp.concatenate([diag_p, sym_p], axis=-1)          # (Tp, 2*Dp)
    pp_in = jnp.concatenate([pro_p, sym_p], axis=-1)           # (Tp, 2*Dp)

    args = (dp_in, pp_in, sym_p,
            packed["wd"], packed["bd"], packed["wp"], packed["bp"],
            packed["wlin"], packed["blin"], packed["wq"], packed["bq"],
            packed["med_rep_t"], packed["ddi"])
    in_bytes = _nbytes(*args)
    scratch_bytes = Mp * Mp * 2
    out_bytes = Tp * Mp * 4 + 4
    flops = (2 * Tp * (2 * Dp) * Dp * 2       # sym_d / sym_p
             + 2 * Tp * Dp * Dp * 3           # lin x3
             + 2 * Tp * Dp * Dp * 3           # query (3 split matmuls)
             + 2 * Tp * Dp * Mp               # result
             + 2 * Tp * Mp * Mp)              # p @ ddi
    vmem = pl.BlockSpec(memory_space=pltpu.MemorySpace.VMEM)

    result_p, batch_neg = pl.pallas_call(
        _make_head_kernel(T, m_real),
        out_shape=(jax.ShapeDtypeStruct((Tp, Mp), jnp.float32),
                   jax.ShapeDtypeStruct((1, 1), jnp.float32)),
        in_specs=[vmem] * 12 + [pl.BlockSpec(memory_space=pl.ANY)],   # ddi stays in HBM
        out_specs=(vmem, vmem),
        scratch_shapes=[pltpu.VMEM((Mp, Mp), jnp.bfloat16),           # ddi landing buffer
                        pltpu.SemaphoreType.DMA],
        compiler_params=pltpu.CompilerParams(
            vmem_limit_bytes=_vmem_limit(in_bytes + scratch_bytes + out_bytes)),
        cost_estimate=pl.CostEstimate(
            flops=flops, transcendentals=Tp * Mp,
            bytes_accessed=in_bytes + out_bytes),
    )(*args)
    # TODO(synk): for Mp >= ~4K, stream ddi in column tiles (grid over columns,
    # accumulate sum(pd_tile * p[:, tile])) instead of a resident (Mp,Mp) scratch.
    return result_p[:T, :m_real], batch_neg[0, 0]


# ------------------------------ public forward -------------------------------

def make_cclnet_forward(params):
    """Run all params-only work once, return a jitted per-forward callable."""
    D = params["wlin"].shape[0]
    M = params["ddi"].shape[0]
    packed = prepare_params(params)        # one-time packing + med MLP kernel

    @jax.jit
    def _fwd(inputs, packed):
        result, batch_neg = cclnet_head(inputs, packed, d_real=D, m_real=M)
        # neg_pred_prob ('nc,nk->nck') rebuilt from `result` in the wrapper
        # instead of materializing (T,M,M) inside the kernel.
        p = jax.nn.sigmoid(result)
        neg_pred_prob = jnp.einsum("nc,nk->nck", p, p)
        return result, neg_pred_prob, batch_neg

    return lambda inputs: _fwd(inputs, packed)


# ------------------------------- reference -----------------------------------

def reference(inputs, params):
    """Plain-JAX f32 replica of the CCLNet forward head (correctness check)."""
    relu = jax.nn.relu
    diag, pro, sym = inputs["diag_cls"], inputs["pro_cls"], inputs["sym_cls"]
    diag_rep = relu(jnp.concatenate([diag, sym], -1)) @ params["wd"] + params["bd"]
    pro_rep = relu(jnp.concatenate([pro, sym], -1)) @ params["wp"] + params["bp"]
    diag_seq = relu(diag_rep) @ params["wlin"] + params["blin"]
    pro_seq = relu(pro_rep) @ params["wlin"] + params["blin"]
    sym_seq = relu(sym) @ params["wlin"] + params["blin"]
    query = (relu(jnp.concatenate([diag_seq, pro_seq, sym_seq], -1))
             @ params["wq"] + params["bq"])
    med_rep = (relu(relu(params["med_init"]) @ params["wm1"] + params["bm1"])
               @ params["wm2"] + params["bm2"])
    result = query @ med_rep.T
    p = jax.nn.sigmoid(result)
    nck = jnp.einsum("nc,nk->nck", p, p)
    batch_neg = (1.0 / params["ddi"].shape[0]) * jnp.mean(
        jnp.sum(nck * params["ddi"][None], axis=(1, 2)))
    return result, nck, batch_neg


def init_params(key, D, M, smiles_dim=1024):
    # Linear weights stored pre-transposed as (in_features, out_features).
    ks = jax.random.split(key, 16)
    w = lambda k, din, dout: (jax.random.normal(k, (din, dout), jnp.float32)
                              / jnp.sqrt(din))
    b = lambda k, dout: 0.01 * jax.random.normal(k, (dout,), jnp.float32)
    ddi_raw = (jax.random.uniform(ks[14], (M, M)) < 0.2).astype(jnp.float32)
    ddi = jnp.maximum(ddi_raw, ddi_raw.T) * (1.0 - jnp.eye(M, dtype=jnp.float32))
    return {
        "wd": w(ks[0], 2 * D, D), "bd": b(ks[1], D),
        "wp": w(ks[2], 2 * D, D), "bp": b(ks[3], D),
        "wlin": w(ks[4], D, D), "blin": b(ks[5], D),
        "wq": w(ks[6], 3 * D, D), "bq": b(ks[7], D),
        "med_init": jax.random.normal(ks[8], (M, smiles_dim), jnp.float32),
        "wm1": w(ks[9], smiles_dim, D), "bm1": b(ks[10], D),
        "wm2": w(ks[11], D, D), "bm2": b(ks[12], D),
        "ddi": ddi,
    }


if __name__ == "__main__":
    # visits, emb_dim, #medications -- deliberately non-aligned to exercise padding
    T, D, M = 5, 48, 145
    key = jax.random.PRNGKey(0)
    k_in, k_par = jax.random.split(key)
    ki = jax.random.split(k_in, 3)
    inputs = {
        # precomputed transformer [CLS] representations per visit (see TODO above)
        "diag_cls": 0.5 * jax.random.normal(ki[0], (T, D), jnp.float32),
        "pro_cls": 0.5 * jax.random.normal(ki[1], (T, D), jnp.float32),
        "sym_cls": 0.5 * jax.random.normal(ki[2], (T, D), jnp.float32),
    }
    params = init_params(k_par, D, M)

    forward = make_cclnet_forward(params)     # packs params + med MLP once
    result, nck, batch_neg = jax.block_until_ready(forward(inputs))

    r_ref, nck_ref, bn_ref = reference(inputs, params)
    assert result.shape == (T, M) and nck.shape == (T, M, M)
    # bf16 MXU operands with f32 accumulation vs a pure-f32 reference.
    assert jnp.allclose(result, r_ref, rtol=3e-2, atol=3e-2), "result mismatch"
    assert jnp.allclose(nck, nck_ref, rtol=3e-2, atol=3e-2), "neg_pred_prob mismatch"
    assert jnp.allclose(batch_neg, bn_ref, rtol=3e-2, atol=3e-2), "batch_neg mismatch"

    print("KERNEL_OK")
</pallas_src>

<mosaic_0001>
module attributes {stable_mosaic.version = 11 : i64} {
  func.func @_med_mlp_kernel(%arg0: memref<1024x256xbf16, #tpu.memory_space<vmem>>, %arg1: memref<128x1024xbf16, #tpu.memory_space<vmem>>, %arg2: memref<128x1xf32, #tpu.memory_space<vmem>>, %arg3: memref<128x128xbf16, #tpu.memory_space<vmem>>, %arg4: memref<128x1xf32, #tpu.memory_space<vmem>>, %arg5: memref<128x256xbf16, #tpu.memory_space<vmem>>) attributes {dimension_semantics = [], scalar_prefetch = 0 : i64, scratch_operands = 0 : i64, tpu.core_type = #tpu.core_type<tc>} {
    %c0 = arith.constant 0 : index
    %c0_0 = arith.constant 0 : index
    %0 = vector.load %arg1[%c0, %c0_0] : memref<128x1024xbf16, #tpu.memory_space<vmem>>, vector<128x1024xbf16>
    %c0_1 = arith.constant 0 : index
    %c0_2 = arith.constant 0 : index
    %1 = vector.load %arg0[%c0_1, %c0_2] : memref<1024x256xbf16, #tpu.memory_space<vmem>>, vector<1024x256xbf16>
    %cst = arith.constant dense<0.000000e+00> : vector<128x256xf32>
    %2 = tpu.matmul %0, %1, %cst {dimension_numbers = #tpu.dot_dimension_numbers<[1], [0], [0], [1], [0, 0, 1, 1], [], []>} : vector<128x1024xbf16>, vector<1024x256xbf16>, vector<128x256xf32> -> vector<128x256xf32>
    %c0_3 = arith.constant 0 : index
    %c0_4 = arith.constant 0 : index
    %3 = vector.load %arg2[%c0_3, %c0_4] : memref<128x1xf32, #tpu.memory_space<vmem>>, vector<128x1xf32>
    %4 = vector.broadcast %3 : vector<128x1xf32> to vector<128x256xf32>
    %5 = arith.addf %2, %4 : vector<128x256xf32>
    %cst_5 = arith.constant 0.000000e+00 : f32
    %6 = vector.broadcast %cst_5 : f32 to vector<128x256xf32>
    %7 = arith.maximumf %5, %6 : vector<128x256xf32>
    %8 = arith.truncf %7 : vector<128x256xf32> to vector<128x256xbf16>
    %c0_6 = arith.constant 0 : index
    %c0_7 = arith.constant 0 : index
    %9 = vector.load %arg3[%c0_6, %c0_7] : memref<128x128xbf16, #tpu.memory_space<vmem>>, vector<128x128xbf16>
    %cst_8 = arith.constant dense<0.000000e+00> : vector<128x256xf32>
    %10 = tpu.matmul %9, %8, %cst_8 {dimension_numbers = #tpu.dot_dimension_numbers<[1], [0], [0], [1], [0, 0, 1, 1], [], []>} : vector<128x128xbf16>, vector<128x256xbf16>, vector<128x256xf32> -> vector<128x256xf32>
    %c0_9 = arith.constant 0 : index
    %c0_10 = arith.constant 0 : index
    %11 = vector.load %arg4[%c0_9, %c0_10] : memref<128x1xf32, #tpu.memory_space<vmem>>, vector<128x1xf32>
    %12 = vector.broadcast %11 : vector<128x1xf32> to vector<128x256xf32>
    %13 = arith.addf %10, %12 : vector<128x256xf32>
    %14 = arith.truncf %13 : vector<128x256xf32> to vector<128x256xbf16>
    %c0_11 = arith.constant 0 : index
    %c0_12 = arith.constant 0 : index
    %15 = vector.load %arg5[%c0_11, %c0_12] : memref<128x256xbf16, #tpu.memory_space<vmem>>, vector<128x256xbf16>
    tpu.vector_store %arg5[%c0_11, %c0_12], %14 {strides = array<i32>} : memref<128x256xbf16, #tpu.memory_space<vmem>>, vector<128x256xbf16>,
    return
  }
}

</mosaic_0001>

<llo_original>
// kernel: tpu_custom_call.1
$region0: #{tpu_custom_call.1}
  #allocation0 [shape = 'u32[]', space=smem, size = 0x4, offset = 0x4, fixed_abs, tag = 'smem constant byte address 0x4 - core index']
  #allocation1 [shape = 'u32[72,128]{1,0:T(1,128)}', space=vmem, size = 0x9000, scoped, tag = 'internal scratch']
  %s0 = inlined_call_operand.hbm [shape: bf16[1024,256], index: 0, kind: input, shape index: {}]
  %s1 = inlined_call_operand.hbm [shape: bf16[128,1024], index: 1, kind: input, shape index: {}]
  %s2 = inlined_call_operand.vmem [shape: f32[128,1], index: 2, kind: input, shape index: {}]
  %s3 = inlined_call_operand.vmem [shape: bf16[128,128], index: 3, kind: input, shape index: {}]
  %s4 = inlined_call_operand.vmem [shape: f32[128,1], index: 4, kind: input, shape index: {}]
  %s5 = inlined_call_operand.hbm [shape: bf16[128,256], index: 5, kind: output, shape index: {}]
  %s6 = sld [smem:[#allocation0]]
  $region38: #{tpu_custom_call.1} parent=0
    _
  %s8 = ssub.s32 1, %s6
  %s9 = scalar_select 0, %s8, %s6
  $region1: #{tpu_custom_call.1} parent=0
    #allocation2 [shape = 'u8[524288]{0}', space=vmem, size = 0x80000, scoped, tag = 'input window, operand 0, single buffered']
    #allocation3 [shape = 's32[1]{0}', space=sflag, size = 0x4, scoped, tag = 'scoped memory for tpu_custom_call.1']
    #allocation4 [shape = 's32[1]{0}', space=sflag, size = 0x4, scoped, tag = 'scoped memory for tpu_custom_call.1']
    #allocation5 [shape = 'u8[262144]{0}', space=vmem, size = 0x40000, scoped, tag = 'input window, operand 1, single buffered']
    #allocation6 [shape = 's32[1]{0}', space=sflag, size = 0x4, scoped, tag = 'scoped memory for tpu_custom_call.1']
    #allocation7 [shape = 'u8[65536]{0}', space=vmem, size = 0x10000, scoped, tag = 'output window, operand 0, single buffered']
    %10 = vsyncpa [#allocation3], 0
    %11 = vsyncpa [#allocation6], 0
    %12 = vsyncpa [#allocation4], 0
    // Predicated region
    $region2: #{tpu_custom_call.1} parent=1 // pred_check
      _
    $region3: #{tpu_custom_call.1} parent=1 // pred_check_branch
      %14 = sbr.rel (0) target = $region5
    $region4: #{tpu_custom_call.1} parent=1 // pred_region
      %16 = vsyncadd [#allocation3], 0
      %s17 = sshll.u32 %s0, 4
      %s18 = int_to_ptr.hbm [resolvable:$true] %s17
      %s19 = sshll.u32 [#allocation2], 4
      %s20 = int_to_ptr.vmem [resolvable:$true] %s19
      %25 = dma.hbm_to_vmem [thread:$0]  %s18, 16384, %s20, [#allocation3], 128, 128, 8
    $region5: #{tpu_custom_call.1} parent=1 // pred_fallthru
      _
    // Predicated region
    $region6: #{tpu_custom_call.1} parent=1 // pred_check
      _
    $region7: #{tpu_custom_call.1} parent=1 // pred_check_branch
      %27 = sbr.rel (0) target = $region9
    $region8: #{tpu_custom_call.1} parent=1 // pred_region
      %29 = vsyncadd [#allocation6], 0
      %s30 = sshll.u32 %s1, 4
      %s31 = int_to_ptr.hbm [resolvable:$true] %s30
      %s32 = sshll.u32 [#allocation5], 4
      %s33 = int_to_ptr.vmem [resolvable:$true] %s32
      %38 = dma.hbm_to_vmem [thread:$0]  %s31, 8192, %s33, [#allocation6], 512, 512, 32
    $region9: #{tpu_custom_call.1} parent=1 // pred_fallthru
      _
    // Predicated region
    $region10: #{tpu_custom_call.1} parent=1 // pred_check
      _
    $region11: #{tpu_custom_call.1} parent=1 // pred_check_branch
      %40 = sbr.rel (0) target = $region13
    $region12: #{tpu_custom_call.1} parent=1 // pred_region
      _
    $region13: #{tpu_custom_call.1} parent=1 // pred_fallthru
      _
    // Predicated region
    $region14: #{tpu_custom_call.1} parent=1 // pred_check
      _
    $region15: #{tpu_custom_call.1} parent=1 // pred_check_branch
      %42 = sbr.rel (0) target = $region17
    $region16: #{tpu_custom_call.1} parent=1 // pred_region
      _
    $region17: #{tpu_custom_call.1} parent=1 // pred_fallthru
      _
    // Predicated region
    $region18: #{tpu_custom_call.1} parent=1 // pred_check
      _
    $region19: #{tpu_custom_call.1} parent=1 // pred_check_branch
      %44 = sbr.rel (0) target = $region21
    $region20: #{tpu_custom_call.1} parent=1 // pred_region
      _
    $region21: #{tpu_custom_call.1} parent=1 // pred_fallthru
      _
    // Predicated region
    $region22: #{tpu_custom_call.1} parent=1 // pred_check
      _
    $region23: #{tpu_custom_call.1} parent=1 // pred_check_branch
      %46 = sbr.rel (0) target = $region25
    $region24: #{tpu_custom_call.1} parent=1 // pred_region
      %48 = dma.done [#allocation3], 16384
    $region25: #{tpu_custom_call.1} parent=1 // pred_fallthru
      _
    // Predicated region
    $region26: #{tpu_custom_call.1} parent=1 // pred_check
      _
    $region27: #{tpu_custom_call.1} parent=1 // pred_check_branch
      %50 = sbr.rel (0) target = $region29
    $region28: #{tpu_custom_call.1} parent=1 // pred_region
      %52 = dma.done [#allocation6], 8192
    $region29: #{tpu_custom_call.1} parent=1 // pred_fallthru
      _
    %v53 = vld [vmem:[#allocation5] sm:$0xff]
    %v54 = vld [vmem:[#allocation5 + $0x8] sm:$0xff]
    %v55 = vld [vmem:[#allocation5 + $0x10] sm:$0xff]
    %v56 = vld [vmem:[#allocation5 + $0x18] sm:$0xff]
    %v57 = vld [vmem:[#allocation5 + $0x20] sm:$0xff]
    %v58 = vld [vmem:[#allocation5 + $0x28] sm:$0xff]
    %v59 = vld [vmem:[#allocation5 + $0x30] sm:$0xff]
    %v60 = vld [vmem:[#allocation5 + $0x38] sm:$0xff]
    %v61 = vld [vmem:[#allocation5 + $0x40] sm:$0xff]
    %v62 = vld [vmem:[#allocation5 + $0x48] sm:$0xff]
    %v63 = vld [vmem:[#allocation5 + $0x50] sm:$0xff]
    %v64 = vld [vmem:[#allocation5 + $0x58] sm:$0xff]
    %v65 = vld [vmem:[#allocation5 + $0x60] sm:$0xff]
    %v66 = vld [vmem:[#allocation5 + $0x68] sm:$0xff]
    %v67 = vld [vmem:[#allocation5 + $0x70] sm:$0xff]
    %v68 = vld [vmem:[#allocation5 + $0x78] sm:$0xff]
    %v69 = vld [vmem:[#allocation5 + $0x80] sm:$0xff]
    %v70 = vld [vmem:[#allocation5 + $0x88] sm:$0xff]
    %v71 = vld [vmem:[#allocation5 + $0x90] sm:$0xff]
    %v72 = vld [vmem:[#allocation5 + $0x98] sm:$0xff]
    %v73 = vld [vmem:[#allocation5 + $0xa0] sm:$0xff]
    %v74 = vld [vmem:[#allocation5 + $0xa8] sm:$0xff]
    %v75 = vld [vmem:[#allocation5 + $0xb0] sm:$0xff]
    %v76 = vld [vmem:[#allocation5 + $0xb8] sm:$0xff]
    %v77 = vld [vmem:[#allocation5 + $0xc0] sm:$0xff]
    %v78 = vld [vmem:[#allocation5 + $0xc8] sm:$0xff]
    %v79 = vld [vmem:[#allocation5 + $0xd0] sm:$0xff]
    %v80 = vld [vmem:[#allocation5 + $0xd8] sm:$0xff]
    %v81 = vld [vmem:[#allocation5 + $0xe0] sm:$0xff]
    %v82 = vld [vmem:[#allocation5 + $0xe8] sm:$0xff]
    %v83 = vld [vmem:[#allocation5 + $0xf0] sm:$0xff]
    %v84 = vld [vmem:[#allocation5 + $0xf8] sm:$0xff]
    %v85 = vld [vmem:[#allocation5 + $0x100] sm:$0xff]
    %v86 = vld [vmem:[#allocation5 + $0x108] sm:$0xff]
    %v87 = vld [vmem:[#allocation5 + $0x110] sm:$0xff]
    %v88 = vld [vmem:[#allocation5 + $0x118] sm:$0xff]
    %v89 = vld [vmem:[#allocation5 + $0x120] sm:$0xff]
    %v90 = vld [vmem:[#allocation5 + $0x128] sm:$0xff]
    %v91 = vld [vmem:[#allocation5 + $0x130] sm:$0xff]
    %v92 = vld [vmem:[#allocation5 + $0x138] sm:$0xff]
    %v93 = vld [vmem:[#allocation5 + $0x140] sm:$0xff]
    %v94 = vld [vmem:[#allocation5 + $0x148] sm:$0xff]
    %v95 = vld [vmem:[#allocation5 + $0x150] sm:$0xff]
    %v96 = vld [vmem:[#allocation5 + $0x158] sm:$0xff]
    %v97 = vld [vmem:[#allocation5 + $0x160] sm:$0xff]
    %v98 = vld [vmem:[#allocation5 + $0x168] sm:$0xff]
    %v99 = vld [vmem:[#allocation5 + $0x170] sm:$0xff]
    %v100 = vld [vmem:[#allocation5 + $0x178] sm:$0xff]
    %v101 = vld [vmem:[#allocation5 + $0x180] sm:$0xff]
    %v102 = vld [vmem:[#allocation5 + $0x188] sm:$0xff]
    %v103 = vld [vmem:[#allocation5 + $0x190] sm:$0xff]
    %v104 = vld [vmem:[#allocation5 + $0x198] sm:$0xff]
    %v105 = vld [vmem:[#allocation5 + $0x1a0] sm:$0xff]
    %v106 = vld [vmem:[#allocation5 + $0x1a8] sm:$0xff]
    %v107 = vld [vmem:[#allocation5 + $0x1b0] sm:$0xff]
    %v108 = vld [vmem:[#allocation5 + $0x1b8] sm:$0xff]
    %v109 = vld [vmem:[#allocation5 + $0x1c0] sm:$0xff]
    %v110 = vld [vmem:[#allocation5 + $0x1c8] sm:$0xff]
    %v111 = vld [vmem:[#allocation5 + $0x1d0] sm:$0xff]
    %v112 = vld [vmem:[#allocation5 + $0x1d8] sm:$0xff]
    %v113 = vld [vmem:[#allocation5 + $0x1e0] sm:$0xff]
    %v114 = vld [vmem:[#allocation5 + $0x1e8] sm:$0xff]
    %v115 = vld [vmem:[#allocation5 + $0x1f0] sm:$0xff]
    %v116 = vld [vmem:[#allocation5 + $0x1f8] sm:$0xff]
    %v117 = vld [vmem:[#allocation2] sm:$0xff]
    %v118 = vld [vmem:[#allocation2 + $0x8] sm:$0xff]
    %v119 = vld [vmem:[#allocation2 + $0x10] sm:$0xff]
    %v120 = vld [vmem:[#allocation2 + $0x18] sm:$0xff]
    %v121 = vld [vmem:[#allocation2 + $0x20] sm:$0xff]
    %v122 = vld [vmem:[#allocation2 + $0x28] sm:$0xff]
    %v123 = vld [vmem:[#allocation2 + $0x30] sm:$0xff]
    %v124 = vld [vmem:[#allocation2 + $0x38] sm:$0xff]
    %v125 = vld [vmem:[#allocation2 + $0x40] sm:$0xff]
    %v126 = vld [vmem:[#allocation2 + $0x48] sm:$0xff]
    %v127 = vld [vmem:[#allocation2 + $0x50] sm:$0xff]
    %v128 = vld [vmem:[#allocation2 + $0x58] sm:$0xff]
    %v129 = vld [vmem:[#allocation2 + $0x60] sm:$0xff]
    %v130 = vld [vmem:[#allocation2 + $0x68] sm:$0xff]
    %v131 = vld [vmem:[#allocation2 + $0x70] sm:$0xff]
    %v132 = vld [vmem:[#allocation2 + $0x78] sm:$0xff]
    %v133 = vld [vmem:[#allocation2 + $0x80] sm:$0xff]
    %v134 = vld [vmem:[#allocation2 + $0x88] sm:$0xff]
    %v135 = vld [vmem:[#allocation2 + $0x90] sm:$0xff]
    %v136 = vld [vmem:[#allocation2 + $0x98] sm:$0xff]
    %v137 = vld [vmem:[#allocation2 + $0xa0] sm:$0xff]
    %v138 = vld [vmem:[#allocation2 + $0xa8] sm:$0xff]
    %v139 = vld [vmem:[#allocation2 + $0xb0] sm:$0xff]
    %v140 = vld [vmem:[#allocation2 + $0xb8] sm:$0xff]
    %v141 = vld [vmem:[#allocation2 + $0xc0] sm:$0xff]
    %v142 = vld [vmem:[#allocation2 + $0xc8] sm:$0xff]
    %v143 = vld [vmem:[#allocation2 + $0xd0] sm:$0xff]
    %v144 = vld [vmem:[#allocation2 + $0xd8] sm:$0xff]
    %v145 = vld [vmem:[#allocation2 + $0xe0] sm:$0xff]
    %v146 = vld [vmem:[#allocation2 + $0xe8] sm:$0xff]
    %v147 = vld [vmem:[#allocation2 + $0xf0] sm:$0xff]
    %v148 = vld [vmem:[#allocation2 + $0xf8] sm:$0xff]
    %v149 = vld [vmem:[#allocation2 + $0x100] sm:$0xff]
    %v150 = vld [vmem:[#allocation2 + $0x108] sm:$0xff]
    %v151 = vld [vmem:[#allocation2 + $0x110] sm:$0xff]
    %v152 = vld [vmem:[#allocation2 + $0x118] sm:$0xff]
    %v153 = vld [vmem:[#allocation2 + $0x120] sm:$0xff]
    %v154 = vld [vmem:[#allocation2 + $0x128] sm:$0xff]
    %v155 = vld [vmem:[#allocation2 + $0x130] sm:$0xff]
    %v156 = vld [vmem:[#allocation2 + $0x138] sm:$0xff]
    %v157 = vld [vmem:[#allocation2 + $0x140] sm:$0xff]
    %v158 = vld [vmem:[#allocation2 + $0x148] sm:$0xff]
    %v159 = vld [vmem:[#allocation2 + $0x150] sm:$0xff]
    %v160 = vld [vmem:[#allocation2 + $0x158] sm:$0xff]
    %v161 = vld [vmem:[#allocation2 + $0x160] sm:$0xff]
    %v162 = vld [vmem:[#allocation2 + $0x168] sm:$0xff]
    %v163 = vld [vmem:[#allocation2 + $0x170] sm:$0xff]
    %v164 = vld [vmem:[#allocation2 + $0x178] sm:$0xff]
    %v165 = vld [vmem:[#allocation2 + $0x180] sm:$0xff]
    %v166 = vld [vmem:[#allocation2 + $0x188] sm:$0xff]
    %v167 = vld [vmem:[#allocation2 + $0x190] sm:$0xff]
    %v168 = vld [vmem:[#allocation2 + $0x198] sm:$0xff]
    %v169 = vld [vmem:[#allocation2 + $0x1a0] sm:$0xff]
    %v170 = vld [vmem:[#allocation2 + $0x1a8] sm:$0xff]
    %v171 = vld [vmem:[#allocation2 + $0x1b0] sm:$0xff]
    %v172 = vld [vmem:[#allocation2 + $0x1b8] sm:$0xff]
    %v173 = vld [vmem:[#allocation2 + $0x1c0] sm:$0xff]
    %v174 = vld [vmem:[#allocation2 + $0x1c8] sm:$0xff]
    %v175 = vld [vmem:[#allocation2 + $0x1d0] sm:$0xff]
    %v176 = vld [vmem:[#allocation2 + $0x1d8] sm:$0xff]
    %v177 = vld [vmem:[#allocation2 + $0x1e0] sm:$0xff]
    %v178 = vld [vmem:[#allocation2 + $0x1e8] sm:$0xff]
    %v179 = vld [vmem:[#allocation2 + $0x1f0] sm:$0xff]
    %v180 = vld [vmem:[#allocation2 + $0x1f8] sm:$0xff]
    %v181 = vld [vmem:[#allocation2 + $0x200] sm:$0xff]
    %v182 = vld [vmem:[#allocation2 + $0x208] sm:$0xff]
    %v183 = vld [vmem:[#allocation2 + $0x210] sm:$0xff]
    %v184 = vld [vmem:[#allocation2 + $0x218] sm:$0xff]
    %v185 = vld [vmem:[#allocation2 + $0x220] sm:$0xff]
    %v186 = vld [vmem:[#allocation2 + $0x228] sm:$0xff]
    %v187 = vld [vmem:[#allocation2 + $0x230] sm:$0xff]
    %v188 = vld [vmem:[#allocation2 + $0x238] sm:$0xff]
    %v189 = vld [vmem:[#allocation2 + $0x240] sm:$0xff]
    %v190 = vld [vmem:[#allocation2 + $0x248] sm:$0xff]
    %v191 = vld [vmem:[#allocation2 + $0x250] sm:$0xff]
    %v192 = vld [vmem:[#allocation2 + $0x258] sm:$0xff]
    %v193 = vld [vmem:[#allocation2 + $0x260] sm:$0xff]
    %v194 = vld [vmem:[#allocation2 + $0x268] sm:$0xff]
    %v195 = vld [vmem:[#allocation2 + $0x270] sm:$0xff]
    %v196 = vld [vmem:[#allocation2 + $0x278] sm:$0xff]
    %v197 = vld [vmem:[#allocation2 + $0x280] sm:$0xff]
    %v198 = vld [vmem:[#allocation2 + $0x288] sm:$0xff]
    %v199 = vld [vmem:[#allocation2 + $0x290] sm:$0xff]
    %v200 = vld [vmem:[#allocation2 + $0x298] sm:$0xff]
    %v201 = vld [vmem:[#allocation2 + $0x2a0] sm:$0xff]
    %v202 = vld [vmem:[#allocation2 + $0x2a8] sm:$0xff]
    %v203 = vld [vmem:[#allocation2 + $0x2b0] sm:$0xff]
    %v204 = vld [vmem:[#allocation2 + $0x2b8] sm:$0xff]
    %v205 = vld [vmem:[#allocation2 + $0x2c0] sm:$0xff]
    %v206 = vld [vmem:[#allocation2 + $0x2c8] sm:$0xff]
    %v207 = vld [vmem:[#allocation2 + $0x2d0] sm:$0xff]
    %v208 = vld [vmem:[#allocation2 + $0x2d8] sm:$0xff]
    %v209 = vld [vmem:[#allocation2 + $0x2e0] sm:$0xff]
    %v210 = vld [vmem:[#allocation2 + $0x2e8] sm:$0xff]
    %v211 = vld [vmem:[#allocation2 + $0x2f0] sm:$0xff]
    %v212 = vld [vmem:[#allocation2 + $0x2f8] sm:$0xff]
    %v213 = vld [vmem:[#allocation2 + $0x300] sm:$0xff]
    %v214 = vld [vmem:[#allocation2 + $0x308] sm:$0xff]
    %v215 = vld [vmem:[#allocation2 + $0x310] sm:$0xff]
    %v216 = vld [vmem:[#allocation2 + $0x318] sm:$0xff]
    %v217 = vld [vmem:[#allocation2 + $0x320] sm:$0xff]
    %v218 = vld [vmem:[#allocation2 + $0x328] sm:$0xff]
    %v219 = vld [vmem:[#allocation2 + $0x330] sm:$0xff]
    %v220 = vld [vmem:[#allocation2 + $0x338] sm:$0xff]
    %v221 = vld [vmem:[#allocation2 + $0x340] sm:$0xff]
    %v222 = vld [vmem:[#allocation2 + $0x348] sm:$0xff]
    %v223 = vld [vmem:[#allocation2 + $0x350] sm:$0xff]
    %v224 = vld [vmem:[#allocation2 + $0x358] sm:$0xff]
    %v225 = vld [vmem:[#allocation2 + $0x360] sm:$0xff]
    %v226 = vld [vmem:[#allocation2 + $0x368] sm:$0xff]
    %v227 = vld [vmem:[#allocation2 + $0x370] sm:$0xff]
    %v228 = vld [vmem:[#allocation2 + $0x378] sm:$0xff]
    %v229 = vld [vmem:[#allocation2 + $0x380] sm:$0xff]
    %v230 = vld [vmem:[#allocation2 + $0x388] sm:$0xff]
    %v231 = vld [vmem:[#allocation2 + $0x390] sm:$0xff]
    %v232 = vld [vmem:[#allocation2 + $0x398] sm:$0xff]
    %v233 = vld [vmem:[#allocation2 + $0x3a0] sm:$0xff]
    %v234 = vld [vmem:[#allocation2 + $0x3a8] sm:$0xff]
    %v235 = vld [vmem:[#allocation2 + $0x3b0] sm:$0xff]
    %v236 = vld [vmem:[#allocation2 + $0x3b8] sm:$0xff]
    %v237 = vld [vmem:[#allocation2 + $0x3c0] sm:$0xff]
    %v238 = vld [vmem:[#allocation2 + $0x3c8] sm:$0xff]
    %v239 = vld [vmem:[#allocation2 + $0x3d0] sm:$0xff]
    %v240 = vld [vmem:[#allocation2 + $0x3d8] sm:$0xff]
    %v241 = vld [vmem:[#allocation2 + $0x3e0] sm:$0xff]
    %v242 = vld [vmem:[#allocation2 + $0x3e8] sm:$0xff]
    %v243 = vld [vmem:[#allocation2 + $0x3f0] sm:$0xff]
    %v244 = vld [vmem:[#allocation2 + $0x3f8] sm:$0xff]
    %v245 = vld [vmem:[%s2] sm:$0xff]
    %v246 = vld [vmem:[%s2 + $0x8] sm:$0xff]
    %v247 = vld [vmem:[%s2 + $0x10] sm:$0xff]
    %v248 = vld [vmem:[%s2 + $0x18] sm:$0xff]
    %v249 = vld [vmem:[%s2 + $0x20] sm:$0xff]
    %v250 = vld [vmem:[%s2 + $0x28] sm:$0xff]
    %v251 = vld [vmem:[%s2 + $0x30] sm:$0xff]
    %v252 = vld [vmem:[%s2 + $0x38] sm:$0xff]
    %v253 = vld [vmem:[%s2 + $0x40] sm:$0xff]
    %v254 = vld [vmem:[%s2 + $0x48] sm:$0xff]
    %v255 = vld [vmem:[%s2 + $0x50] sm:$0xff]
    %v256 = vld [vmem:[%s2 + $0x58] sm:$0xff]
    %v257 = vld [vmem:[%s2 + $0x60] sm:$0xff]
    %v258 = vld [vmem:[%s2 + $0x68] sm:$0xff]
    %v259 = vld [vmem:[%s2 + $0x70] sm:$0xff]
    %v260 = vld [vmem:[%s2 + $0x78] sm:$0xff]
    %262 = vset.pattern.permute.xlu0 0
    %263 = vperm.xlu0 %262, %v245
    %v264 = vpop.permute.xlu0 %263
    %267 = vset.pattern.permute.xlu0 0
    %268 = vperm.xlu0 %267, %v246
    %v269 = vpop.permute.xlu0 %268
    %272 = vset.pattern.permute.xlu0 0
    %273 = vperm.xlu0 %272, %v247
    %v274 = vpop.permute.xlu0 %273
    %277 = vset.pattern.permute.xlu0 0
    %278 = vperm.xlu0 %277, %v248
    %v279 = vpop.permute.xlu0 %278
    %282 = vset.pattern.permute.xlu0 0
    %283 = vperm.xlu0 %282, %v249
    %v284 = vpop.permute.xlu0 %283
    %287 = vset.pattern.permute.xlu0 0
    %288 = vperm.xlu0 %287, %v250
    %v289 = vpop.permute.xlu0 %288
    %292 = vset.pattern.permute.xlu0 0
    %293 = vperm.xlu0 %292, %v251
    %v294 = vpop.permute.xlu0 %293
    %297 = vset.pattern.permute.xlu0 0
    %298 = vperm.xlu0 %297, %v252
    %v299 = vpop.permute.xlu0 %298
    %302 = vset.pattern.permute.xlu0 0
    %303 = vperm.xlu0 %302, %v253
    %v304 = vpop.permute.xlu0 %303
    %307 = vset.pattern.permute.xlu0 0
    %308 = vperm.xlu0 %307, %v254
    %v309 = vpop.permute.xlu0 %308
    %312 = vset.pattern.permute.xlu0 0
    %313 = vperm.xlu0 %312, %v255
    %v314 = vpop.permute.xlu0 %313
    %317 = vset.pattern.permute.xlu0 0
    %318 = vperm.xlu0 %317, %v256
    %v319 = vpop.permute.xlu0 %318
    %322 = vset.pattern.permute.xlu0 0
    %323 = vperm.xlu0 %322, %v257
    %v324 = vpop.permute.xlu0 %323
    %327 = vset.pattern.permute.xlu0 0
    %328 = vperm.xlu0 %327, %v258
    %v329 = vpop.permute.xlu0 %328
    %332 = vset.pattern.permute.xlu0 0
    %333 = vperm.xlu0 %332, %v259
    %v334 = vpop.permute.xlu0 %333
    %337 = vset.pattern.permute.xlu0 0
    %338 = vperm.xlu0 %337, %v260
    %v339 = vpop.permute.xlu0 %338
    %v405 = vunpack.c.l.b16 %v53
    %v406 = vunpack.c.h.b16 %v53
    %v407 = vunpack.c.l.b16 %v54
    %v408 = vunpack.c.h.b16 %v54
    %v409 = vunpack.c.l.b16 %v55
    %v410 = vunpack.c.h.b16 %v55
    %v411 = vunpack.c.l.b16 %v56
    %v412 = vunpack.c.h.b16 %v56
    %v413 = vunpack.c.l.b16 %v57
    %v414 = vunpack.c.h.b16 %v57
    %v415 = vunpack.c.l.b16 %v58
    %v416 = vunpack.c.h.b16 %v58
    %v417 = vunpack.c.l.b16 %v59
    %v418 = vunpack.c.h.b16 %v59
    %v419 = vunpack.c.l.b16 %v60
    %v420 = vunpack.c.h.b16 %v60
    %v421 = vunpack.c.l.b16 %v61
    %v422 = vunpack.c.h.b16 %v61
    %v423 = vunpack.c.l.b16 %v62
    %v424 = vunpack.c.h.b16 %v62
    %v425 = vunpack.c.l.b16 %v63
    %v426 = vunpack.c.h.b16 %v63
    %v427 = vunpack.c.l.b16 %v64
    %v428 = vunpack.c.h.b16 %v64
    %v429 = vunpack.c.l.b16 %v65
    %v430 = vunpack.c.h.b16 %v65
    %v431 = vunpack.c.l.b16 %v66
    %v432 = vunpack.c.h.b16 %v66
    %v433 = vunpack.c.l.b16 %v67
    %v434 = vunpack.c.h.b16 %v67
    %v435 = vunpack.c.l.b16 %v68
    %v436 = vunpack.c.h.b16 %v68
    %v437 = vunpack.c.l.b16 %v69
    %v438 = vunpack.c.h.b16 %v69
    %v439 = vunpack.c.l.b16 %v70
    %v440 = vunpack.c.h.b16 %v70
    %v441 = vunpack.c.l.b16 %v71
    %v442 = vunpack.c.h.b16 %v71
    %v443 = vunpack.c.l.b16 %v72
    %v444 = vunpack.c.h.b16 %v72
    %v445 = vunpack.c.l.b16 %v73
    %v446 = vunpack.c.h.b16 %v73
    %v447 = vunpack.c.l.b16 %v74
    %v448 = vunpack.c.h.b16 %v74
    %v449 = vunpack.c.l.b16 %v75
    %v450 = vunpack.c.h.b16 %v75
    %v451 = vunpack.c.l.b16 %v76
    %v452 = vunpack.c.h.b16 %v76
    %v453 = vunpack.c.l.b16 %v77
    %v454 = vunpack.c.h.b16 %v77
    %v455 = vunpack.c.l.b16 %v78
    %v456 = vunpack.c.h.b16 %v78
    %v457 = vunpack.c.l.b16 %v79
    %v458 = vunpack.c.h.b16 %v79
    %v459 = vunpack.c.l.b16 %v80
    %v460 = vunpack.c.h.b16 %v80
    %v461 = vunpack.c.l.b16 %v81
    %v462 = vunpack.c.h.b16 %v81
    %v463 = vunpack.c.l.b16 %v82
    %v464 = vunpack.c.h.b16 %v82
    %v465 = vunpack.c.l.b16 %v83
    %v466 = vunpack.c.h.b16 %v83
    %v467 = vunpack.c.l.b16 %v84
    %v468 = vunpack.c.h.b16 %v84
    %v469 = vunpack.c.l.b16 %v85
    %v470 = vunpack.c.h.b16 %v85
    %v471 = vunpack.c.l.b16 %v86
    %v472 = vunpack.c.h.b16 %v86
    %v473 = vunpack.c.l.b16 %v87
    %v474 = vunpack.c.h.b16 %v87
    %v475 = vunpack.c.l.b16 %v88
    %v476 = vunpack.c.h.b16 %v88
    %v477 = vunpack.c.l.b16 %v89
    %v478 = vunpack.c.h.b16 %v89
    %v479 = vunpack.c.l.b16 %v90
    %v480 = vunpack.c.h.b16 %v90
    %v481 = vunpack.c.l.b16 %v91
    %v482 = vunpack.c.h.b16 %v91
    %v483 = vunpack.c.l.b16 %v92
    %v484 = vunpack.c.h.b16 %v92
    %v485 = vunpack.c.l.b16 %v93
    %v486 = vunpack.c.h.b16 %v93
    %v487 = vunpack.c.l.b16 %v94
    %v488 = vunpack.c.h.b16 %v94
    %v489 = vunpack.c.l.b16 %v95
    %v490 = vunpack.c.h.b16 %v95
    %v491 = vunpack.c.l.b16 %v96
    %v492 = vunpack.c.h.b16 %v96
    %v493 = vunpack.c.l.b16 %v97
    %v494 = vunpack.c.h.b16 %v97
    %v495 = vunpack.c.l.b16 %v98
    %v496 = vunpack.c.h.b16 %v98
    %v497 = vunpack.c.l.b16 %v99
    %v498 = vunpack.c.h.b16 %v99
    %v499 = vunpack.c.l.b16 %v100
    %v500 = vunpack.c.h.b16 %v100
    %v501 = vunpack.c.l.b16 %v101
    %v502 = vunpack.c.h.b16 %v101
    %v503 = vunpack.c.l.b16 %v102
    %v504 = vunpack.c.h.b16 %v102
    %v505 = vunpack.c.l.b16 %v103
    %v506 = vunpack.c.h.b16 %v103
    %v507 = vunpack.c.l.b16 %v104
    %v508 = vunpack.c.h.b16 %v104
    %v509 = vunpack.c.l.b16 %v105
    %v510 = vunpack.c.h.b16 %v105
    %v511 = vunpack.c.l.b16 %v106
    %v512 = vunpack.c.h.b16 %v106
    %v513 = vunpack.c.l.b16 %v107
    %v514 = vunpack.c.h.b16 %v107
    %v515 = vunpack.c.l.b16 %v108
    %v516 = vunpack.c.h.b16 %v108
    %v517 = vunpack.c.l.b16 %v109
    %v518 = vunpack.c.h.b16 %v109
    %v519 = vunpack.c.l.b16 %v110
    %v520 = vunpack.c.h.b16 %v110
    %v521 = vunpack.c.l.b16 %v111
    %v522 = vunpack.c.h.b16 %v111
    %v523 = vunpack.c.l.b16 %v112
    %v524 = vunpack.c.h.b16 %v112
    %v525 = vunpack.c.l.b16 %v113
    %v526 = vunpack.c.h.b16 %v113
    %v527 = vunpack.c.l.b16 %v114
    %v528 = vunpack.c.h.b16 %v114
    %v529 = vunpack.c.l.b16 %v115
    %v530 = vunpack.c.h.b16 %v115
    %v531 = vunpack.c.l.b16 %v116
    %v532 = vunpack.c.h.b16 %v116
    %v533 = vpack.c.b16 %v413, %v405
    %v534 = vpack.c.b16 %v414, %v406
    %v535 = vpack.c.b16 %v415, %v407
    %v536 = vpack.c.b16 %v416, %v408
    %v537 = vpack.c.b16 %v417, %v409
    %v538 = vpack.c.b16 %v418, %v410
    %v539 = vpack.c.b16 %v419, %v411
    %v540 = vpack.c.b16 %v420, %v412
    %v541 = vpack.c.b16 %v429, %v421
    %v542 = vpack.c.b16 %v430, %v422
    %v543 = vpack.c.b16 %v431, %v423
    %v544 = vpack.c.b16 %v432, %v424
    %v545 = vpack.c.b16 %v433, %v425
    %v546 = vpack.c.b16 %v434, %v426
    %v547 = vpack.c.b16 %v435, %v427
    %v548 = vpack.c.b16 %v436, %v428
    %v549 = vpack.c.b16 %v445, %v437
    %v550 = vpack.c.b16 %v446, %v438
    %v551 = vpack.c.b16 %v447, %v439
    %v552 = vpack.c.b16 %v448, %v440
    %v553 = vpack.c.b16 %v449, %v441
    %v554 = vpack.c.b16 %v450, %v442
    %v555 = vpack.c.b16 %v451, %v443
    %v556 = vpack.c.b16 %v452, %v444
    %v557 = vpack.c.b16 %v461, %v453
    %v558 = vpack.c.b16 %v462, %v454
    %v559 = vpack.c.b16 %v463, %v455
    %v560 = vpack.c.b16 %v464, %v456
    %v561 = vpack.c.b16 %v465, %v457
    %v562 = vpack.c.b16 %v466, %v458
    %v563 = vpack.c.b16 %v467, %v459
    %v564 = vpack.c.b16 %v468, %v460
    %v565 = vpack.c.b16 %v477, %v469
    %v566 = vpack.c.b16 %v478, %v470
    %v567 = vpack.c.b16 %v479, %v471
    %v568 = vpack.c.b16 %v480, %v472
    %v569 = vpack.c.b16 %v481, %v473
    %v570 = vpack.c.b16 %v482, %v474
    %v571 = vpack.c.b16 %v483, %v475
    %v572 = vpack.c.b16 %v484, %v476
    %v573 = vpack.c.b16 %v493, %v485
    %v574 = vpack.c.b16 %v494, %v486
    %v575 = vpack.c.b16 %v495, %v487
    %v576 = vpack.c.b16 %v496, %v488
    %v577 = vpack.c.b16 %v497, %v489
    %v578 = vpack.c.b16 %v498, %v490
    %v579 = vpack.c.b16 %v499, %v491
    %v580 = vpack.c.b16 %v500, %v492
    %v581 = vpack.c.b16 %v509, %v501
    %v582 = vpack.c.b16 %v510, %v502
    %v583 = vpack.c.b16 %v511, %v503
    %v584 = vpack.c.b16 %v512, %v504
    %v585 = vpack.c.b16 %v513, %v505
    %v586 = vpack.c.b16 %v514, %v506
    %v587 = vpack.c.b16 %v515, %v507
    %v588 = vpack.c.b16 %v516, %v508
    %v589 = vpack.c.b16 %v525, %v517
    %v590 = vpack.c.b16 %v526, %v518
    %v591 = vpack.c.b16 %v527, %v519
    %v592 = vpack.c.b16 %v528, %v520
    %v593 = vpack.c.b16 %v529, %v521
    %v594 = vpack.c.b16 %v530, %v522
    %v595 = vpack.c.b16 %v531, %v523
    %v596 = vpack.c.b16 %v532, %v524
    %v789 = vunpack.c.l.b16 %v117
    %v790 = vunpack.c.h.b16 %v117
    %v791 = vunpack.c.l.b16 %v118
    %v792 = vunpack.c.h.b16 %v118
    %v793 = vunpack.c.l.b16 %v119
    %v794 = vunpack.c.h.b16 %v119
    %v795 = vunpack.c.l.b16 %v120
    %v796 = vunpack.c.h.b16 %v120
    %v797 = vunpack.c.l.b16 %v121
    %v798 = vunpack.c.h.b16 %v121
    %v799 = vunpack.c.l.b16 %v122
    %v800 = vunpack.c.h.b16 %v122
    %v801 = vunpack.c.l.b16 %v123
    %v802 = vunpack.c.h.b16 %v123
    %v803 = vunpack.c.l.b16 %v124
    %v804 = vunpack.c.h.b16 %v124
    %v805 = vunpack.c.l.b16 %v125
    %v806 = vunpack.c.h.b16 %v125
    %v807 = vunpack.c.l.b16 %v126
    %v808 = vunpack.c.h.b16 %v126
    %v809 = vunpack.c.l.b16 %v127
    %v810 = vunpack.c.h.b16 %v127
    %v811 = vunpack.c.l.b16 %v128
    %v812 = vunpack.c.h.b16 %v128
    %v813 = vunpack.c.l.b16 %v129
    %v814 = vunpack.c.h.b16 %v129
    %v815 = vunpack.c.l.b16 %v130
    %v816 = vunpack.c.h.b16 %v130
    %v817 = vunpack.c.l.b16 %v131
    %v818 = vunpack.c.h.b16 %v131
    %v819 = vunpack.c.l.b16 %v132
    %v820 = vunpack.c.h.b16 %v132
    %v821 = vunpack.c.l.b16 %v133
    %v822 = vunpack.c.h.b16 %v133
    %v823 = vunpack.c.l.b16 %v134
    %v824 = vunpack.c.h.b16 %v134
    %v825 = vunpack.c.l.b16 %v135
    %v826 = vunpack.c.h.b16 %v135
    %v827 = vunpack.c.l.b16 %v136
    %v828 = vunpack.c.h.b16 %v136
    %v829 = vunpack.c.l.b16 %v137
    %v830 = vunpack.c.h.b16 %v137
    %v831 = vunpack.c.l.b16 %v138
    %v832 = vunpack.c.h.b16 %v138
    %v833 = vunpack.c.l.b16 %v139
    %v834 = vunpack.c.h.b16 %v139
    %v835 = vunpack.c.l.b16 %v140
    %v836 = vunpack.c.h.b16 %v140
    %v837 = vunpack.c.l.b16 %v141
    %v838 = vunpack.c.h.b16 %v141
    %v839 = vunpack.c.l.b16 %v142
    %v840 = vunpack.c.h.b16 %v142
    %v841 = vunpack.c.l.b16 %v143
    %v842 = vunpack.c.h.b16 %v143
    %v843 = vunpack.c.l.b16 %v144
    %v844 = vunpack.c.h.b16 %v144
    %v845 = vunpack.c.l.b16 %v145
    %v846 = vunpack.c.h.b16 %v145
    %v847 = vunpack.c.l.b16 %v146
    %v848 = vunpack.c.h.b16 %v146
    %v849 = vunpack.c.l.b16 %v147
    %v850 = vunpack.c.h.b16 %v147
    %v851 = vunpack.c.l.b16 %v148
    %v852 = vunpack.c.h.b16 %v148
    %v853 = vunpack.c.l.b16 %v149
    %v854 = vunpack.c.h.b16 %v149
    %v855 = vunpack.c.l.b16 %v150
    %v856 = vunpack.c.h.b16 %v150
    %v857 = vunpack.c.l.b16 %v151
    %v858 = vunpack.c.h.b16 %v151
    %v859 = vunpack.c.l.b16 %v152
    %v860 = vunpack.c.h.b16 %v152
    %v861 = vunpack.c.l.b16 %v153
    %v862 = vunpack.c.h.b16 %v153
    %v863 = vunpack.c.l.b16 %v154
    %v864 = vunpack.c.h.b16 %v154
    %v865 = vunpack.c.l.b16 %v155
    %v866 = vunpack.c.h.b16 %v155
    %v867 = vunpack.c.l.b16 %v156
    %v868 = vunpack.c.h.b16 %v156
    %v869 = vunpack.c.l.b16 %v157
    %v870 = vunpack.c.h.b16 %v157
    %v871 = vunpack.c.l.b16 %v158
    %v872 = vunpack.c.h.b16 %v158
    %v873 = vunpack.c.l.b16 %v159
    %v874 = vunpack.c.h.b16 %v159
    %v875 = vunpack.c.l.b16 %v160
    %v876 = vunpack.c.h.b16 %v160
    %v877 = vunpack.c.l.b16 %v161
    %v878 = vunpack.c.h.b16 %v161
    %v879 = vunpack.c.l.b16 %v162
    %v880 = vunpack.c.h.b16 %v162
    %v881 = vunpack.c.l.b16 %v163
    %v882 = vunpack.c.h.b16 %v163
    %v883 = vunpack.c.l.b16 %v164
    %v884 = vunpack.c.h.b16 %v164
    %v885 = vunpack.c.l.b16 %v165
    %v886 = vunpack.c.h.b16 %v165
    %v887 = vunpack.c.l.b16 %v166
    %v888 = vunpack.c.h.b16 %v166
    %v889 = vunpack.c.l.b16 %v167
    %v890 = vunpack.c.h.b16 %v167
    %v891 = vunpack.c.l.b16 %v168
    %v892 = vunpack.c.h.b16 %v168
    %v893 = vunpack.c.l.b16 %v169
    %v894 = vunpack.c.h.b16 %v169
    %v895 = vunpack.c.l.b16 %v170
    %v896 = vunpack.c.h.b16 %v170
    %v897 = vunpack.c.l.b16 %v171
    %v898 = vunpack.c.h.b16 %v171
    %v899 = vunpack.c.l.b16 %v172
    %v900 = vunpack.c.h.b16 %v172
    %v901 = vunpack.c.l.b16 %v173
    %v902 = vunpack.c.h.b16 %v173
    %v903 = vunpack.c.l.b16 %v174
    %v904 = vunpack.c.h.b16 %v174
    %v905 = vunpack.c.l.b16 %v175
    %v906 = vunpack.c.h.b16 %v175
    %v907 = vunpack.c.l.b16 %v176
    %v908 = vunpack.c.h.b16 %v176
    %v909 = vunpack.c.l.b16 %v177
    %v910 = vunpack.c.h.b16 %v177
    %v911 = vunpack.c.l.b16 %v178
    %v912 = vunpack.c.h.b16 %v178
    %v913 = vunpack.c.l.b16 %v179
    %v914 = vunpack.c.h.b16 %v179
    %v915 = vunpack.c.l.b16 %v180
    %v916 = vunpack.c.h.b16 %v180
    %v917 = vunpack.c.l.b16 %v181
    %v918 = vunpack.c.h.b16 %v181
    %v919 = vunpack.c.l.b16 %v182
    %v920 = vunpack.c.h.b16 %v182
    %v921 = vunpack.c.l.b16 %v183
    %v922 = vunpack.c.h.b16 %v183
    %v923 = vunpack.c.l.b16 %v184
    %v924 = vunpack.c.h.b16 %v184
    %v925 = vunpack.c.l.b16 %v185
    %v926 = vunpack.c.h.b16 %v185
    %v927 = vunpack.c.l.b16 %v186
    %v928 = vunpack.c.h.b16 %v186
    %v929 = vunpack.c.l.b16 %v187
    %v930 = vunpack.c.h.b16 %v187
    %v931 = vunpack.c.l.b16 %v188
    %v932 = vunpack.c.h.b16 %v188
    %v933 = vunpack.c.l.b16 %v189
    %v934 = vunpack.c.h.b16 %v189
    %v935 = vunpack.c.l.b16 %v190
    %v936 = vunpack.c.h.b16 %v190
    %v937 = vunpack.c.l.b16 %v191
    %v938 = vunpack.c.h.b16 %v191
    %v939 = vunpack.c.l.b16 %v192
    %v940 = vunpack.c.h.b16 %v192
    %v941 = vunpack.c.l.b16 %v193
    %v942 = vunpack.c.h.b16 %v193
    %v943 = vunpack.c.l.b16 %v194
    %v944 = vunpack.c.h.b16 %v194
    %v945 = vunpack.c.l.b16 %v195
    %v946 = vunpack.c.h.b16 %v195
    %v947 = vunpack.c.l.b16 %v196
    %v948 = vunpack.c.h.b16 %v196
    %v949 = vunpack.c.l.b16 %v197
    %v950 = vunpack.c.h.b16 %v197
    %v951 = vunpack.c.l.b16 %v198
    %v952 = vunpack.c.h.b16 %v198
    %v953 = vunpack.c.l.b16 %v199
    %v954 = vunpack.c.h.b16 %v199
    %v955 = vunpack.c.l.b16 %v200
    %v956 = vunpack.c.h.b16 %v200
    %v957 = vunpack.c.l.b16 %v201
    %v958 = vunpack.c.h.b16 %v201
    %v959 = vunpack.c.l.b16 %v202
    %v960 = vunpack.c.h.b16 %v202
    %v961 = vunpack.c.l.b16 %v203
    %v962 = vunpack.c.h.b16 %v203
    %v963 = vunpack.c.l.b16 %v204
    %v964 = vunpack.c.h.b16 %v204
    %v965 = vunpack.c.l.b16 %v205
    %v966 = vunpack.c.h.b16 %v205
    %v967 = vunpack.c.l.b16 %v206
    %v968 = vunpack.c.h.b16 %v206
    %v969 = vunpack.c.l.b16 %v207
    %v970 = vunpack.c.h.b16 %v207
    %v971 = vunpack.c.l.b16 %v208
    %v972 = vunpack.c.h.b16 %v208
    %v973 = vunpack.c.l.b16 %v209
    %v974 = vunpack.c.h.b16 %v209
    %v975 = vunpack.c.l.b16 %v210
    %v976 = vunpack.c.h.b16 %v210
    %v977 = vunpack.c.l.b16 %v211
    %v978 = vunpack.c.h.b16 %v211
    %v979 = vunpack.c.l.b16 %v212
    %v980 = vunpack.c.h.b16 %v212
    %v981 = vunpack.c.l.b16 %v213
    %v982 = vunpack.c.h.b16 %v213
    %v983 = vunpack.c.l.b16 %v214
    %v984 = vunpack.c.h.b16 %v214
    %v985 = vunpack.c.l.b16 %v215
    %v986 = vunpack.c.h.b16 %v215
    %v987 = vunpack.c.l.b16 %v216
    %v988 = vunpack.c.h.b16 %v216
    %v989 = vunpack.c.l.b16 %v217
    %v990 = vunpack.c.h.b16 %v217
    %v991 = vunpack.c.l.b16 %v218
    %v992 = vunpack.c.h.b16 %v218
    %v993 = vunpack.c.l.b16 %v219
    %v994 = vunpack.c.h.b16 %v219
    %v995 = vunpack.c.l.b16 %v220
    %v996 = vunpack.c.h.b16 %v220
    %v997 = vunpack.c.l.b16 %v221
    %v998 = vunpack.c.h.b16 %v221
    %v999 = vunpack.c.l.b16 %v222
    %v1000 = vunpack.c.h.b16 %v222
    %v1001 = vunpack.c.l.b16 %v223
    %v1002 = vunpack.c.h.b16 %v223
    %v1003 = vunpack.c.l.b16 %v224
    %v1004 = vunpack.c.h.b16 %v224
    %v1005 = vunpack.c.l.b16 %v225
    %v1006 = vunpack.c.h.b16 %v225
    %v1007 = vunpack.c.l.b16 %v226
    %v1008 = vunpack.c.h.b16 %v226
    %v1009 = vunpack.c.l.b16 %v227
    %v1010 = vunpack.c.h.b16 %v227
    %v1011 = vunpack.c.l.b16 %v228
    %v1012 = vunpack.c.h.b16 %v228
    %v1013 = vunpack.c.l.b16 %v229
    %v1014 = vunpack.c.h.b16 %v229
    %v1015 = vunpack.c.l.b16 %v230
    %v1016 = vunpack.c.h.b16 %v230
    %v1017 = vunpack.c.l.b16 %v231
    %v1018 = vunpack.c.h.b16 %v231
    %v1019 = vunpack.c.l.b16 %v232
    %v1020 = vunpack.c.h.b16 %v232
    %v1021 = vunpack.c.l.b16 %v233
    %v1022 = vunpack.c.h.b16 %v233
    %v1023 = vunpack.c.l.b16 %v234
    %v1024 = vunpack.c.h.b16 %v234
    %v1025 = vunpack.c.l.b16 %v235
    %v1026 = vunpack.c.h.b16 %v235
    %v1027 = vunpack.c.l.b16 %v236
    %v1028 = vunpack.c.h.b16 %v236
    %v1029 = vunpack.c.l.b16 %v237
    %v1030 = vunpack.c.h.b16 %v237
    %v1031 = vunpack.c.l.b16 %v238
    %v1032 = vunpack.c.h.b16 %v238
    %v1033 = vunpack.c.l.b16 %v239
    %v1034 = vunpack.c.h.b16 %v239
    %v1035 = vunpack.c.l.b16 %v240
    %v1036 = vunpack.c.h.b16 %v240
    %v1037 = vunpack.c.l.b16 %v241
    %v1038 = vunpack.c.h.b16 %v241
    %v1039 = vunpack.c.l.b16 %v242
    %v1040 = vunpack.c.h.b16 %v242
    %v1041 = vunpack.c.l.b16 %v243
    %v1042 = vunpack.c.h.b16 %v243
    %v1043 = vunpack.c.l.b16 %v244
    %v1044 = vunpack.c.h.b16 %v244
    %v1045 = vpack.c.b16 %v791, %v789
    %v1046 = vpack.c.b16 %v792, %v790
    %v1047 = vpack.c.b16 %v795, %v793
    %v1048 = vpack.c.b16 %v796, %v794
    %v1049 = vpack.c.b16 %v799, %v797
    %v1050 = vpack.c.b16 %v800, %v798
    %v1051 = vpack.c.b16 %v803, %v801
    %v1052 = vpack.c.b16 %v804, %v802
    %v1053 = vpack.c.b16 %v807, %v805
    %v1054 = vpack.c.b16 %v808, %v806
    %v1055 = vpack.c.b16 %v811, %v809
    %v1056 = vpack.c.b16 %v812, %v810
    %v1057 = vpack.c.b16 %v815, %v813
    %v1058 = vpack.c.b16 %v816, %v814
    %v1059 = vpack.c.b16 %v819, %v817
    %v1060 = vpack.c.b16 %v820, %v818
    %v1061 = vpack.c.b16 %v823, %v821
    %v1062 = vpack.c.b16 %v824, %v822
    %v1063 = vpack.c.b16 %v827, %v825
    %v1064 = vpack.c.b16 %v828, %v826
    %v1065 = vpack.c.b16 %v831, %v829
    %v1066 = vpack.c.b16 %v832, %v830
    %v1067 = vpack.c.b16 %v835, %v833
    %v1068 = vpack.c.b16 %v836, %v834
    %v1069 = vpack.c.b16 %v839, %v837
    %v1070 = vpack.c.b16 %v840, %v838
    %v1071 = vpack.c.b16 %v843, %v841
    %v1072 = vpack.c.b16 %v844, %v842
    %v1073 = vpack.c.b16 %v847, %v845
    %v1074 = vpack.c.b16 %v848, %v846
    %v1075 = vpack.c.b16 %v851, %v849
    %v1076 = vpack.c.b16 %v852, %v850
    %v1077 = vpack.c.b16 %v855, %v853
    %v1078 = vpack.c.b16 %v856, %v854
    %v1079 = vpack.c.b16 %v859, %v857
    %v1080 = vpack.c.b16 %v860, %v858
    %v1081 = vpack.c.b16 %v863, %v861
    %v1082 = vpack.c.b16 %v864, %v862
    %v1083 = vpack.c.b16 %v867, %v865
    %v1084 = vpack.c.b16 %v868, %v866
    %v1085 = vpack.c.b16 %v871, %v869
    %v1086 = vpack.c.b16 %v872, %v870
    %v1087 = vpack.c.b16 %v875, %v873
    %v1088 = vpack.c.b16 %v876, %v874
    %v1089 = vpack.c.b16 %v879, %v877
    %v1090 = vpack.c.b16 %v880, %v878
    %v1091 = vpack.c.b16 %v883, %v881
    %v1092 = vpack.c.b16 %v884, %v882
    %v1093 = vpack.c.b16 %v887, %v885
    %v1094 = vpack.c.b16 %v888, %v886
    %v1095 = vpack.c.b16 %v891, %v889
    %v1096 = vpack.c.b16 %v892, %v890
    %v1097 = vpack.c.b16 %v895, %v893
    %v1098 = vpack.c.b16 %v896, %v894
    %v1099 = vpack.c.b16 %v899, %v897
    %v1100 = vpack.c.b16 %v900, %v898
    %v1101 = vpack.c.b16 %v903, %v901
    %v1102 = vpack.c.b16 %v904, %v902
    %v1103 = vpack.c.b16 %v907, %v905
    %v1104 = vpack.c.b16 %v908, %v906
    %v1105 = vpack.c.b16 %v911, %v909
    %v1106 = vpack.c.b16 %v912, %v910
    %v1107 = vpack.c.b16 %v915, %v913
    %v1108 = vpack.c.b16 %v916, %v914
    %v1109 = vpack.c.b16 %v919, %v917
    %v1110 = vpack.c.b16 %v920, %v918
    %v1111 = vpack.c.b16 %v923, %v921
    %v1112 = vpack.c.b16 %v924, %v922
    %v1113 = vpack.c.b16 %v927, %v925
    %v1114 = vpack.c.b16 %v928, %v926
    %v1115 = vpack.c.b16 %v931, %v929
    %v1116 = vpack.c.b16 %v932, %v930
    %v1117 = vpack.c.b16 %v935, %v933
    %v1118 = vpack.c.b16 %v936, %v934
    %v1119 = vpack.c.b16 %v939, %v937
    %v1120 = vpack.c.b16 %v940, %v938
    %v1121 = vpack.c.b16 %v943, %v941
    %v1122 = vpack.c.b16 %v944, %v942
    %v1123 = vpack.c.b16 %v947, %v945
    %v1124 = vpack.c.b16 %v948, %v946
    %v1125 = vpack.c.b16 %v951, %v949
    %v1126 = vpack.c.b16 %v952, %v950
    %v1127 = vpack.c.b16 %v955, %v953
    %v1128 = vpack.c.b16 %v956, %v954
    %v1129 = vpack.c.b16 %v959, %v957
    %v1130 = vpack.c.b16 %v960, %v958
    %v1131 = vpack.c.b16 %v963, %v961
    %v1132 = vpack.c.b16 %v964, %v962
    %v1133 = vpack.c.b16 %v967, %v965
    %v1134 = vpack.c.b16 %v968, %v966
    %v1135 = vpack.c.b16 %v971, %v969
    %v1136 = vpack.c.b16 %v972, %v970
    %v1137 = vpack.c.b16 %v975, %v973
    %v1138 = vpack.c.b16 %v976, %v974
    %v1139 = vpack.c.b16 %v979, %v977
    %v1140 = vpack.c.b16 %v980, %v978
    %v1141 = vpack.c.b16 %v983, %v981
    %v1142 = vpack.c.b16 %v984, %v982
    %v1143 = vpack.c.b16 %v987, %v985
    %v1144 = vpack.c.b16 %v988, %v986
    %v1145 = vpack.c.b16 %v991, %v989
    %v1146 = vpack.c.b16 %v992, %v990
    %v1147 = vpack.c.b16 %v995, %v993
    %v1148 = vpack.c.b16 %v996, %v994
    %v1149 = vpack.c.b16 %v999, %v997
    %v1150 = vpack.c.b16 %v1000, %v998
    %v1151 = vpack.c.b16 %v1003, %v1001
    %v1152 = vpack.c.b16 %v1004, %v1002
    %v1153 = vpack.c.b16 %v1007, %v1005
    %v1154 = vpack.c.b16 %v1008, %v1006
    %v1155 = vpack.c.b16 %v1011, %v1009
    %v1156 = vpack.c.b16 %v1012, %v1010
    %v1157 = vpack.c.b16 %v1015, %v1013
    %v1158 = vpack.c.b16 %v1016, %v1014
    %v1159 = vpack.c.b16 %v1019, %v1017
    %v1160 = vpack.c.b16 %v1020, %v1018
    %v1161 = vpack.c.b16 %v1023, %v1021
    %v1162 = vpack.c.b16 %v1024, %v1022
    %v1163 = vpack.c.b16 %v1027, %v1025
    %v1164 = vpack.c.b16 %v1028, %v1026
    %v1165 = vpack.c.b16 %v1031, %v1029
    %v1166 = vpack.c.b16 %v1032, %v1030
    %v1167 = vpack.c.b16 %v1035, %v1033
    %v1168 = vpack.c.b16 %v1036, %v1034
    %v1169 = vpack.c.b16 %v1039, %v1037
    %v1170 = vpack.c.b16 %v1040, %v1038
    %v1171 = vpack.c.b16 %v1043, %v1041
    %v1172 = vpack.c.b16 %v1044, %v1042
    %1301 = vmatpush.bf16.msra.mxu0 %v1059
    %1302 = vmatpush.bf16.msra.mxu0 %v1057
    %1303 = vmatpush.bf16.msra.mxu0 %v1055
    %1304 = vmatpush.bf16.msra.mxu0 %v1053
    %1305 = vmatpush.bf16.msra.mxu0 %v1051
    %1306 = vmatpush.bf16.msra.mxu0 %v1049
    %1307 = vmatpush.bf16.msra.mxu0 %v1047
    %1308 = vmatpush.bf16.msra.mxu0 %v1045
    %1309 = vmatmul.bf16.gmra.mxu0 %v533
    %v1310 = vpop.f32.mrf.mxu0
    %v1311 = vadd.f32 %v264, %v1310
    %v1312 = vpop.f32.mrf.mxu0
    %v1313 = vadd.f32 %v269, %v1312
    %1314 = vmatmul.bf16.gmra.mxu0 %v541
    %v1315 = vpop.f32.mrf.mxu0
    %v1316 = vadd.f32 %v274, %v1315
    %v1317 = vpop.f32.mrf.mxu0
    %v1318 = vadd.f32 %v279, %v1317
    %1319 = vmatmul.bf16.gmra.mxu0 %v549
    %v1320 = vpop.f32.mrf.mxu0
    %v1321 = vadd.f32 %v284, %v1320
    %v1322 = vpop.f32.mrf.mxu0
    %v1323 = vadd.f32 %v289, %v1322
    %1324 = vmatmul.bf16.gmra.mxu0 %v557
    %v1325 = vpop.f32.mrf.mxu0
    %v1326 = vadd.f32 %v294, %v1325
    %v1327 = vpop.f32.mrf.mxu0
    %v1328 = vadd.f32 %v299, %v1327
    %1329 = vmatmul.bf16.gmra.mxu0 %v565
    %v1330 = vpop.f32.mrf.mxu0
    %v1331 = vadd.f32 %v304, %v1330
    %v1332 = vpop.f32.mrf.mxu0
    %v1333 = vadd.f32 %v309, %v1332
    %1334 = vmatmul.bf16.gmra.mxu0 %v573
    %v1335 = vpop.f32.mrf.mxu0
    %v1336 = vadd.f32 %v314, %v1335
    %v1337 = vpop.f32.mrf.mxu0
    %v1338 = vadd.f32 %v319, %v1337
    %1339 = vmatmul.bf16.gmra.mxu0 %v581
    %v1340 = vpop.f32.mrf.mxu0
    %v1341 = vadd.f32 %v324, %v1340
    %v1342 = vpop.f32.mrf.mxu0
    %v1343 = vadd.f32 %v329, %v1342
    %1344 = vmatmul.bf16.gmra.mxu0 %v589
    %v1345 = vpop.f32.mrf.mxu0
    %v1346 = vadd.f32 %v334, %v1345
    %v1347 = vpop.f32.mrf.mxu0
    %v1348 = vadd.f32 %v339, %v1347
    %1349 = vdwg.mxu0
    %1350 = vmatpush.bf16.msra.mxu0 %v1075
    %1351 = vmatpush.bf16.msra.mxu0 %v1073
    %1352 = vmatpush.bf16.msra.mxu0 %v1071
    %1353 = vmatpush.bf16.msra.mxu0 %v1069
    %1354 = vmatpush.bf16.msra.mxu0 %v1067
    %1355 = vmatpush.bf16.msra.mxu0 %v1065
    %1356 = vmatpush.bf16.msra.mxu0 %v1063
    %1357 = vmatpush.bf16.msra.mxu0 %v1061
    %1358 = vmatmul.bf16.gmra.mxu0 %v534
    %v1359 = vpop.f32.mrf.mxu0
    %v1360 = vadd.f32 %v1311, %v1359
    %v1361 = vpop.f32.mrf.mxu0
    %v1362 = vadd.f32 %v1313, %v1361
    %1363 = vmatmul.bf16.gmra.mxu0 %v542
    %v1364 = vpop.f32.mrf.mxu0
    %v1365 = vadd.f32 %v1316, %v1364
    %v1366 = vpop.f32.mrf.mxu0
    %v1367 = vadd.f32 %v1318, %v1366
    %1368 = vmatmul.bf16.gmra.mxu0 %v550
    %v1369 = vpop.f32.mrf.mxu0
    %v1370 = vadd.f32 %v1321, %v1369
    %v1371 = vpop.f32.mrf.mxu0
    %v1372 = vadd.f32 %v1323, %v1371
    %1373 = vmatmul.bf16.gmra.mxu0 %v558
    %v1374 = vpop.f32.mrf.mxu0
    %v1375 = vadd.f32 %v1326, %v1374
    %v1376 = vpop.f32.mrf.mxu0
    %v1377 = vadd.f32 %v1328, %v1376
    %1378 = vmatmul.bf16.gmra.mxu0 %v566
    %v1379 = vpop.f32.mrf.mxu0
    %v1380 = vadd.f32 %v1331, %v1379
    %v1381 = vpop.f32.mrf.mxu0
    %v1382 = vadd.f32 %v1333, %v1381
    %1383 = vmatmul.bf16.gmra.mxu0 %v574
    %v1384 = vpop.f32.mrf.mxu0
    %v1385 = vadd.f32 %v1336, %v1384
    %v1386 = vpop.f32.mrf.mxu0
    %v1387 = vadd.f32 %v1338, %v1386
    %1388 = vmatmul.bf16.gmra.mxu0 %v582
    %v1389 = vpop.f32.mrf.mxu0
    %v1390 = vadd.f32 %v1341, %v1389
    %v1391 = vpop.f32.mrf.mxu0
    %v1392 = vadd.f32 %v1343, %v1391
    %1393 = vmatmul.bf16.gmra.mxu0 %v590
    %v1394 = vpop.f32.mrf.mxu0
    %v1395 = vadd.f32 %v1346, %v1394
    %v1396 = vpop.f32.mrf.mxu0
    %v1397 = vadd.f32 %v1348, %v1396
    %1398 = vdwg.mxu0
    %1399 = vmatpush.bf16.msra.mxu0 %v1091
    %1400 = vmatpush.bf16.msra.mxu0 %v1089
    %1401 = vmatpush.bf16.msra.mxu0 %v1087
    %1402 = vmatpush.bf16.msra.mxu0 %v1085
    %1403 = vmatpush.bf16.msra.mxu0 %v1083
    %1404 = vmatpush.bf16.msra.mxu0 %v1081
    %1405 = vmatpush.bf16.msra.mxu0 %v1079
    %1406 = vmatpush.bf16.msra.mxu0 %v1077
    %1407 = vmatmul.bf16.gmra.mxu0 %v535
    %v1408 = vpop.f32.mrf.mxu0
    %v1409 = vadd.f32 %v1360, %v1408
    %v1410 = vpop.f32.mrf.mxu0
    %v1411 = vadd.f32 %v1362, %v1410
    %1412 = vmatmul.bf16.gmra.mxu0 %v543
    %v1413 = vpop.f32.mrf.mxu0
    %v1414 = vadd.f32 %v1365, %v1413
    %v1415 = vpop.f32.mrf.mxu0
    %v1416 = vadd.f32 %v1367, %v1415
    %1417 = vmatmul.bf16.gmra.mxu0 %v551
    %v1418 = vpop.f32.mrf.mxu0
    %v1419 = vadd.f32 %v1370, %v1418
    %v1420 = vpop.f32.mrf.mxu0
    %v1421 = vadd.f32 %v1372, %v1420
    %1422 = vmatmul.bf16.gmra.mxu0 %v559
    %v1423 = vpop.f32.mrf.mxu0
    %v1424 = vadd.f32 %v1375, %v1423
    %v1425 = vpop.f32.mrf.mxu0
    %v1426 = vadd.f32 %v1377, %v1425
    %1427 = vmatmul.bf16.gmra.mxu0 %v567
    %v1428 = vpop.f32.mrf.mxu0
    %v1429 = vadd.f32 %v1380, %v1428
    %v1430 = vpop.f32.mrf.mxu0
    %v1431 = vadd.f32 %v1382, %v1430
    %1432 = vmatmul.bf16.gmra.mxu0 %v575
    %v1433 = vpop.f32.mrf.mxu0
    %v1434 = vadd.f32 %v1385, %v1433
    %v1435 = vpop.f32.mrf.mxu0
    %v1436 = vadd.f32 %v1387, %v1435
    %1437 = vmatmul.bf16.gmra.mxu0 %v583
    %v1438 = vpop.f32.mrf.mxu0
    %v1439 = vadd.f32 %v1390, %v1438
    %v1440 = vpop.f32.mrf.mxu0
    %v1441 = vadd.f32 %v1392, %v1440
    %1442 = vmatmul.bf16.gmra.mxu0 %v591
    %v1443 = vpop.f32.mrf.mxu0
    %v1444 = vadd.f32 %v1395, %v1443
    %v1445 = vpop.f32.mrf.mxu0
    %v1446 = vadd.f32 %v1397, %v1445
    %1447 = vdwg.mxu0
    %1448 = vmatpush.bf16.msra.mxu0 %v1107
    %1449 = vmatpush.bf16.msra.mxu0 %v1105
    %1450 = vmatpush.bf16.msra.mxu0 %v1103
    %1451 = vmatpush.bf16.msra.mxu0 %v1101
    %1452 = vmatpush.bf16.msra.mxu0 %v1099
    %1453 = vmatpush.bf16.msra.mxu0 %v1097
    %1454 = vmatpush.bf16.msra.mxu0 %v1095
    %1455 = vmatpush.bf16.msra.mxu0 %v1093
    %1456 = vmatmul.bf16.gmra.mxu0 %v536
    %v1457 = vpop.f32.mrf.mxu0
    %v1458 = vadd.f32 %v1409, %v1457
    %v1459 = vpop.f32.mrf.mxu0
    %v1460 = vadd.f32 %v1411, %v1459
    %1461 = vmatmul.bf16.gmra.mxu0 %v544
    %v1462 = vpop.f32.mrf.mxu0
    %v1463 = vadd.f32 %v1414, %v1462
    %v1464 = vpop.f32.mrf.mxu0
    %v1465 = vadd.f32 %v1416, %v1464
    %1466 = vmatmul.bf16.gmra.mxu0 %v552
    %v1467 = vpop.f32.mrf.mxu0
    %v1468 = vadd.f32 %v1419, %v1467
    %v1469 = vpop.f32.mrf.mxu0
    %v1470 = vadd.f32 %v1421, %v1469
    %1471 = vmatmul.bf16.gmra.mxu0 %v560
    %v1472 = vpop.f32.mrf.mxu0
    %v1473 = vadd.f32 %v1424, %v1472
    %v1474 = vpop.f32.mrf.mxu0
    %v1475 = vadd.f32 %v1426, %v1474
    %1476 = vmatmul.bf16.gmra.mxu0 %v568
    %v1477 = vpop.f32.mrf.mxu0
    %v1478 = vadd.f32 %v1429, %v1477
    %v1479 = vpop.f32.mrf.mxu0
    %v1480 = vadd.f32 %v1431, %v1479
    %1481 = vmatmul.bf16.gmra.mxu0 %v576
    %v1482 = vpop.f32.mrf.mxu0
    %v1483 = vadd.f32 %v1434, %v1482
    %v1484 = vpop.f32.mrf.mxu0
    %v1485 = vadd.f32 %v1436, %v1484
    %1486 = vmatmul.bf16.gmra.mxu0 %v584
    %v1487 = vpop.f32.mrf.mxu0
    %v1488 = vadd.f32 %v1439, %v1487
    %v1489 = vpop.f32.mrf.mxu0
    %v1490 = vadd.f32 %v1441, %v1489
    %1491 = vmatmul.bf16.gmra.mxu0 %v592
    %v1492 = vpop.f32.mrf.mxu0
    %v1493 = vadd.f32 %v1444, %v1492
    %v1494 = vpop.f32.mrf.mxu0
    %v1495 = vadd.f32 %v1446, %v1494
    %1496 = vdwg.mxu0
    %1497 = vmatpush.bf16.msra.mxu0 %v1123
    %1498 = vmatpush.bf16.msra.mxu0 %v1121
    %1499 = vmatpush.bf16.msra.mxu0 %v1119
    %1500 = vmatpush.bf16.msra.mxu0 %v1117
    %1501 = vmatpush.bf16.msra.mxu0 %v1115
    %1502 = vmatpush.bf16.msra.mxu0 %v1113
    %1503 = vmatpush.bf16.msra.mxu0 %v1111
    %1504 = vmatpush.bf16.msra.mxu0 %v1109
    %1505 = vmatmul.bf16.gmra.mxu0 %v537
    %v1506 = vpop.f32.mrf.mxu0
    %v1507 = vadd.f32 %v1458, %v1506
    %v1508 = vpop.f32.mrf.mxu0
    %v1509 = vadd.f32 %v1460, %v1508
    %1510 = vmatmul.bf16.gmra.mxu0 %v545
    %v1511 = vpop.f32.mrf.mxu0
    %v1512 = vadd.f32 %v1463, %v1511
    %v1513 = vpop.f32.mrf.mxu0
    %v1514 = vadd.f32 %v1465, %v1513
    %1515 = vmatmul.bf16.gmra.mxu0 %v553
    %v1516 = vpop.f32.mrf.mxu0
    %v1517 = vadd.f32 %v1468, %v1516
    %v1518 = vpop.f32.mrf.mxu0
    %v1519 = vadd.f32 %v1470, %v1518
    %1520 = vmatmul.bf16.gmra.mxu0 %v561
    %v1521 = vpop.f32.mrf.mxu0
    %v1522 = vadd.f32 %v1473, %v1521
    %v1523 = vpop.f32.mrf.mxu0
    %v1524 = vadd.f32 %v1475, %v1523
    %1525 = vmatmul.bf16.gmra.mxu0 %v569
    %v1526 = vpop.f32.mrf.mxu0
    %v1527 = vadd.f32 %v1478, %v1526
    %v1528 = vpop.f32.mrf.mxu0
    %v1529 = vadd.f32 %v1480, %v1528
    %1530 = vmatmul.bf16.gmra.mxu0 %v577
    %v1531 = vpop.f32.mrf.mxu0
    %v1532 = vadd.f32 %v1483, %v1531
    %v1533 = vpop.f32.mrf.mxu0
    %v1534 = vadd.f32 %v1485, %v1533
    %1535 = vmatmul.bf16.gmra.mxu0 %v585
    %v1536 = vpop.f32.mrf.mxu0
    %v1537 = vadd.f32 %v1488, %v1536
    %v1538 = vpop.f32.mrf.mxu0
    %v1539 = vadd.f32 %v1490, %v1538
    %1540 = vmatmul.bf16.gmra.mxu0 %v593
    %v1541 = vpop.f32.mrf.mxu0
    %v1542 = vadd.f32 %v1493, %v1541
    %v1543 = vpop.f32.mrf.mxu0
    %v1544 = vadd.f32 %v1495, %v1543
    %1545 = vdwg.mxu0
    %1546 = vmatpush.bf16.msra.mxu0 %v1139
    %1547 = vmatpush.bf16.msra.mxu0 %v1137
    %1548 = vmatpush.bf16.msra.mxu0 %v1135
    %1549 = vmatpush.bf16.msra.mxu0 %v1133
    %1550 = vmatpush.bf16.msra.mxu0 %v1131
    %1551 = vmatpush.bf16.msra.mxu0 %v1129
    %1552 = vmatpush.bf16.msra.mxu0 %v1127
    %1553 = vmatpush.bf16.msra.mxu0 %v1125
    %1554 = vmatmul.bf16.gmra.mxu0 %v538
    %v1555 = vpop.f32.mrf.mxu0
    %v1556 = vadd.f32 %v1507, %v1555
    %v1557 = vpop.f32.mrf.mxu0
    %v1558 = vadd.f32 %v1509, %v1557
    %1559 = vmatmul.bf16.gmra.mxu0 %v546
    %v1560 = vpop.f32.mrf.mxu0
    %v1561 = vadd.f32 %v1512, %v1560
    %v1562 = vpop.f32.mrf.mxu0
    %v1563 = vadd.f32 %v1514, %v1562
    %1564 = vmatmul.bf16.gmra.mxu0 %v554
    %v1565 = vpop.f32.mrf.mxu0
    %v1566 = vadd.f32 %v1517, %v1565
    %v1567 = vpop.f32.mrf.mxu0
    %v1568 = vadd.f32 %v1519, %v1567
    %1569 = vmatmul.bf16.gmra.mxu0 %v562
    %v1570 = vpop.f32.mrf.mxu0
    %v1571 = vadd.f32 %v1522, %v1570
    %v1572 = vpop.f32.mrf.mxu0
    %v1573 = vadd.f32 %v1524, %v1572
    %1574 = vmatmul.bf16.gmra.mxu0 %v570
    %v1575 = vpop.f32.mrf.mxu0
    %v1576 = vadd.f32 %v1527, %v1575
    %v1577 = vpop.f32.mrf.mxu0
    %v1578 = vadd.f32 %v1529, %v1577
    %1579 = vmatmul.bf16.gmra.mxu0 %v578
    %v1580 = vpop.f32.mrf.mxu0
    %v1581 = vadd.f32 %v1532, %v1580
    %v1582 = vpop.f32.mrf.mxu0
    %v1583 = vadd.f32 %v1534, %v1582
    %1584 = vmatmul.bf16.gmra.mxu0 %v586
    %v1585 = vpop.f32.mrf.mxu0
    %v1586 = vadd.f32 %v1537, %v1585
    %v1587 = vpop.f32.mrf.mxu0
    %v1588 = vadd.f32 %v1539, %v1587
    %1589 = vmatmul.bf16.gmra.mxu0 %v594
    %v1590 = vpop.f32.mrf.mxu0
    %v1591 = vadd.f32 %v1542, %v1590
    %v1592 = vpop.f32.mrf.mxu0
    %v1593 = vadd.f32 %v1544, %v1592
    %1594 = vdwg.mxu0
    %1595 = vmatpush.bf16.msra.mxu0 %v1155
    %1596 = vmatpush.bf16.msra.mxu0 %v1153
    %1597 = vmatpush.bf16.msra.mxu0 %v1151
    %1598 = vmatpush.bf16.msra.mxu0 %v1149
    %1599 = vmatpush.bf16.msra.mxu0 %v1147
    %1600 = vmatpush.bf16.msra.mxu0 %v1145
    %1601 = vmatpush.bf16.msra.mxu0 %v1143
    %1602 = vmatpush.bf16.msra.mxu0 %v1141
    %1603 = vmatmul.bf16.gmra.mxu0 %v539
    %v1604 = vpop.f32.mrf.mxu0
    %v1605 = vadd.f32 %v1556, %v1604
    %v1606 = vpop.f32.mrf.mxu0
    %v1607 = vadd.f32 %v1558, %v1606
    %1608 = vmatmul.bf16.gmra.mxu0 %v547
    %v1609 = vpop.f32.mrf.mxu0
    %v1610 = vadd.f32 %v1561, %v1609
    %v1611 = vpop.f32.mrf.mxu0
    %v1612 = vadd.f32 %v1563, %v1611
    %1613 = vmatmul.bf16.gmra.mxu0 %v555
    %v1614 = vpop.f32.mrf.mxu0
    %v1615 = vadd.f32 %v1566, %v1614
    %v1616 = vpop.f32.mrf.mxu0
    %v1617 = vadd.f32 %v1568, %v1616
    %1618 = vmatmul.bf16.gmra.mxu0 %v563
    %v1619 = vpop.f32.mrf.mxu0
    %v1620 = vadd.f32 %v1571, %v1619
    %v1621 = vpop.f32.mrf.mxu0
    %v1622 = vadd.f32 %v1573, %v1621
    %1623 = vmatmul.bf16.gmra.mxu0 %v571
    %v1624 = vpop.f32.mrf.mxu0
    %v1625 = vadd.f32 %v1576, %v1624
    %v1626 = vpop.f32.mrf.mxu0
    %v1627 = vadd.f32 %v1578, %v1626
    %1628 = vmatmul.bf16.gmra.mxu0 %v579
    %v1629 = vpop.f32.mrf.mxu0
    %v1630 = vadd.f32 %v1581, %v1629
    %v1631 = vpop.f32.mrf.mxu0
    %v1632 = vadd.f32 %v1583, %v1631
    %1633 = vmatmul.bf16.gmra.mxu0 %v587
    %v1634 = vpop.f32.mrf.mxu0
    %v1635 = vadd.f32 %v1586, %v1634
    %v1636 = vpop.f32.mrf.mxu0
    %v1637 = vadd.f32 %v1588, %v1636
    %1638 = vmatmul.bf16.gmra.mxu0 %v595
    %v1639 = vpop.f32.mrf.mxu0
    %v1640 = vadd.f32 %v1591, %v1639
    %v1641 = vpop.f32.mrf.mxu0
    %v1642 = vadd.f32 %v1593, %v1641
    %1643 = vdwg.mxu0
    %1644 = vmatpush.bf16.msra.mxu0 %v1171
    %1645 = vmatpush.bf16.msra.mxu0 %v1169
    %1646 = vmatpush.bf16.msra.mxu0 %v1167
    %1647 = vmatpush.bf16.msra.mxu0 %v1165
    %1648 = vmatpush.bf16.msra.mxu0 %v1163
    %1649 = vmatpush.bf16.msra.mxu0 %v1161
    %1650 = vmatpush.bf16.msra.mxu0 %v1159
    %1651 = vmatpush.bf16.msra.mxu0 %v1157
    %1652 = vmatmul.bf16.gmra.mxu0 %v540
    %v1653 = vpop.f32.mrf.mxu0
    %v1654 = vadd.f32 %v1605, %v1653
    %v1655 = vpop.f32.mrf.mxu0
    %v1656 = vadd.f32 %v1607, %v1655
    %1657 = vmatmul.bf16.gmra.mxu0 %v548
    %v1658 = vpop.f32.mrf.mxu0
    %v1659 = vadd.f32 %v1610, %v1658
    %v1660 = vpop.f32.mrf.mxu0
    %v1661 = vadd.f32 %v1612, %v1660
    %1662 = vmatmul.bf16.gmra.mxu0 %v556
    %v1663 = vpop.f32.mrf.mxu0
    %v1664 = vadd.f32 %v1615, %v1663
    %v1665 = vpop.f32.mrf.mxu0
    %v1666 = vadd.f32 %v1617, %v1665
    %1667 = vmatmul.bf16.gmra.mxu0 %v564
    %v1668 = vpop.f32.mrf.mxu0
    %v1669 = vadd.f32 %v1620, %v1668
    %v1670 = vpop.f32.mrf.mxu0
    %v1671 = vadd.f32 %v1622, %v1670
    %1672 = vmatmul.bf16.gmra.mxu0 %v572
    %v1673 = vpop.f32.mrf.mxu0
    %v1674 = vadd.f32 %v1625, %v1673
    %v1675 = vpop.f32.mrf.mxu0
    %v1676 = vadd.f32 %v1627, %v1675
    %1677 = vmatmul.bf16.gmra.mxu0 %v580
    %v1678 = vpop.f32.mrf.mxu0
    %v1679 = vadd.f32 %v1630, %v1678
    %v1680 = vpop.f32.mrf.mxu0
    %v1681 = vadd.f32 %v1632, %v1680
    %1682 = vmatmul.bf16.gmra.mxu0 %v588
    %v1683 = vpop.f32.mrf.mxu0
    %v1684 = vadd.f32 %v1635, %v1683
    %v1685 = vpop.f32.mrf.mxu0
    %v1686 = vadd.f32 %v1637, %v1685
    %1687 = vmatmul.bf16.gmra.mxu0 %v596
    %v1688 = vpop.f32.mrf.mxu0
    %v1689 = vadd.f32 %v1640, %v1688
    %v1690 = vpop.f32.mrf.mxu0
    %v1691 = vadd.f32 %v1642, %v1690
    %1692 = vdwg.mxu0
    %1693 = vmatpush.bf16.msra.mxu0 %v1060
    %1694 = vmatpush.bf16.msra.mxu0 %v1058
    %1695 = vmatpush.bf16.msra.mxu0 %v1056
    %1696 = vmatpush.bf16.msra.mxu0 %v1054
    %1697 = vmatpush.bf16.msra.mxu0 %v1052
    %1698 = vmatpush.bf16.msra.mxu0 %v1050
    %1699 = vmatpush.bf16.msra.mxu0 %v1048
    %1700 = vmatpush.bf16.msra.mxu0 %v1046
    %1701 = vmatmul.bf16.gmra.mxu0 %v533
    %v1702 = vpop.f32.mrf.mxu0
    %v1703 = vadd.f32 %v264, %v1702
    %v1704 = vpop.f32.mrf.mxu0
    %v1705 = vadd.f32 %v269, %v1704
    %1706 = vmatmul.bf16.gmra.mxu0 %v541
    %v1707 = vpop.f32.mrf.mxu0
    %v1708 = vadd.f32 %v274, %v1707
    %v1709 = vpop.f32.mrf.mxu0
    %v1710 = vadd.f32 %v279, %v1709
    %1711 = vmatmul.bf16.gmra.mxu0 %v549
    %v1712 = vpop.f32.mrf.mxu0
    %v1713 = vadd.f32 %v284, %v1712
    %v1714 = vpop.f32.mrf.mxu0
    %v1715 = vadd.f32 %v289, %v1714
    %1716 = vmatmul.bf16.gmra.mxu0 %v557
    %v1717 = vpop.f32.mrf.mxu0
    %v1718 = vadd.f32 %v294, %v1717
    %v1719 = vpop.f32.mrf.mxu0
    %v1720 = vadd.f32 %v299, %v1719
    %1721 = vmatmul.bf16.gmra.mxu0 %v565
    %v1722 = vpop.f32.mrf.mxu0
    %v1723 = vadd.f32 %v304, %v1722
    %v1724 = vpop.f32.mrf.mxu0
    %v1725 = vadd.f32 %v309, %v1724
    %1726 = vmatmul.bf16.gmra.mxu0 %v573
    %v1727 = vpop.f32.mrf.mxu0
    %v1728 = vadd.f32 %v314, %v1727
    %v1729 = vpop.f32.mrf.mxu0
    %v1730 = vadd.f32 %v319, %v1729
    %1731 = vmatmul.bf16.gmra.mxu0 %v581
    %v1732 = vpop.f32.mrf.mxu0
    %v1733 = vadd.f32 %v324, %v1732
    %v1734 = vpop.f32.mrf.mxu0
    %v1735 = vadd.f32 %v329, %v1734
    %1736 = vmatmul.bf16.gmra.mxu0 %v589
    %v1737 = vpop.f32.mrf.mxu0
    %v1738 = vadd.f32 %v334, %v1737
    %v1739 = vpop.f32.mrf.mxu0
    %v1740 = vadd.f32 %v339, %v1739
    %1741 = vdwg.mxu0
    %1742 = vmatpush.bf16.msra.mxu0 %v1076
    %1743 = vmatpush.bf16.msra.mxu0 %v1074
    %1744 = vmatpush.bf16.msra.mxu0 %v1072
    %1745 = vmatpush.bf16.msra.mxu0 %v1070
    %1746 = vmatpush.bf16.msra.mxu0 %v1068
    %1747 = vmatpush.bf16.msra.mxu0 %v1066
    %1748 = vmatpush.bf16.msra.mxu0 %v1064
    %1749 = vmatpush.bf16.msra.mxu0 %v1062
    %1750 = vmatmul.bf16.gmra.mxu0 %v534
    %v1751 = vpop.f32.mrf.mxu0
    %v1752 = vadd.f32 %v1703, %v1751
    %v1753 = vpop.f32.mrf.mxu0
    %v1754 = vadd.f32 %v1705, %v1753
    %1755 = vmatmul.bf16.gmra.mxu0 %v542
    %v1756 = vpop.f32.mrf.mxu0
    %v1757 = vadd.f32 %v1708, %v1756
    %v1758 = vpop.f32.mrf.mxu0
    %v1759 = vadd.f32 %v1710, %v1758
    %1760 = vmatmul.bf16.gmra.mxu0 %v550
    %v1761 = vpop.f32.mrf.mxu0
    %v1762 = vadd.f32 %v1713, %v1761
    %v1763 = vpop.f32.mrf.mxu0
    %v1764 = vadd.f32 %v1715, %v1763
    %1765 = vmatmul.bf16.gmra.mxu0 %v558
    %v1766 = vpop.f32.mrf.mxu0
    %v1767 = vadd.f32 %v1718, %v1766
    %v1768 = vpop.f32.mrf.mxu0
    %v1769 = vadd.f32 %v1720, %v1768
    %1770 = vmatmul.bf16.gmra.mxu0 %v566
    %v1771 = vpop.f32.mrf.mxu0
    %v1772 = vadd.f32 %v1723, %v1771
    %v1773 = vpop.f32.mrf.mxu0
    %v1774 = vadd.f32 %v1725, %v1773
    %1775 = vmatmul.bf16.gmra.mxu0 %v574
    %v1776 = vpop.f32.mrf.mxu0
    %v1777 = vadd.f32 %v1728, %v1776
    %v1778 = vpop.f32.mrf.mxu0
    %v1779 = vadd.f32 %v1730, %v1778
    %1780 = vmatmul.bf16.gmra.mxu0 %v582
    %v1781 = vpop.f32.mrf.mxu0
    %v1782 = vadd.f32 %v1733, %v1781
    %v1783 = vpop.f32.mrf.mxu0
    %v1784 = vadd.f32 %v1735, %v1783
    %1785 = vmatmul.bf16.gmra.mxu0 %v590
    %v1786 = vpop.f32.mrf.mxu0
    %v1787 = vadd.f32 %v1738, %v1786
    %v1788 = vpop.f32.mrf.mxu0
    %v1789 = vadd.f32 %v1740, %v1788
    %1790 = vdwg.mxu0
    %1791 = vmatpush.bf16.msra.mxu0 %v1092
    %1792 = vmatpush.bf16.msra.mxu0 %v1090
    %1793 = vmatpush.bf16.msra.mxu0 %v1088
    %1794 = vmatpush.bf16.msra.mxu0 %v1086
    %1795 = vmatpush.bf16.msra.mxu0 %v1084
    %1796 = vmatpush.bf16.msra.mxu0 %v1082
    %1797 = vmatpush.bf16.msra.mxu0 %v1080
    %1798 = vmatpush.bf16.msra.mxu0 %v1078
    %1799 = vmatmul.bf16.gmra.mxu0 %v535
    %v1800 = vpop.f32.mrf.mxu0
    %v1801 = vadd.f32 %v1752, %v1800
    %v1802 = vpop.f32.mrf.mxu0
    %v1803 = vadd.f32 %v1754, %v1802
    %1804 = vmatmul.bf16.gmra.mxu0 %v543
    %v1805 = vpop.f32.mrf.mxu0
    %v1806 = vadd.f32 %v1757, %v1805
    %v1807 = vpop.f32.mrf.mxu0
    %v1808 = vadd.f32 %v1759, %v1807
    %1809 = vmatmul.bf16.gmra.mxu0 %v551
    %v1810 = vpop.f32.mrf.mxu0
    %v1811 = vadd.f32 %v1762, %v1810
    %v1812 = vpop.f32.mrf.mxu0
    %v1813 = vadd.f32 %v1764, %v1812
    %1814 = vmatmul.bf16.gmra.mxu0 %v559
    %v1815 = vpop.f32.mrf.mxu0
    %v1816 = vadd.f32 %v1767, %v1815
    %v1817 = vpop.f32.mrf.mxu0
    %v1818 = vadd.f32 %v1769, %v1817
    %1819 = vmatmul.bf16.gmra.mxu0 %v567
    %v1820 = vpop.f32.mrf.mxu0
    %v1821 = vadd.f32 %v1772, %v1820
    %v1822 = vpop.f32.mrf.mxu0
    %v1823 = vadd.f32 %v1774, %v1822
    %1824 = vmatmul.bf16.gmra.mxu0 %v575
    %v1825 = vpop.f32.mrf.mxu0
    %v1826 = vadd.f32 %v1777, %v1825
    %v1827 = vpop.f32.mrf.mxu0
    %v1828 = vadd.f32 %v1779, %v1827
    %1829 = vmatmul.bf16.gmra.mxu0 %v583
    %v1830 = vpop.f32.mrf.mxu0
    %v1831 = vadd.f32 %v1782, %v1830
    %v1832 = vpop.f32.mrf.mxu0
    %v1833 = vadd.f32 %v1784, %v1832
    %1834 = vmatmul.bf16.gmra.mxu0 %v591
    %v1835 = vpop.f32.mrf.mxu0
    %v1836 = vadd.f32 %v1787, %v1835
    %v1837 = vpop.f32.mrf.mxu0
    %v1838 = vadd.f32 %v1789, %v1837
    %1839 = vdwg.mxu0
    %1840 = vmatpush.bf16.msra.mxu0 %v1108
    %1841 = vmatpush.bf16.msra.mxu0 %v1106
    %1842 = vmatpush.bf16.msra.mxu0 %v1104
    %1843 = vmatpush.bf16.msra.mxu0 %v1102
    %1844 = vmatpush.bf16.msra.mxu0 %v1100
    %1845 = vmatpush.bf16.msra.mxu0 %v1098
    %1846 = vmatpush.bf16.msra.mxu0 %v1096
    %1847 = vmatpush.bf16.msra.mxu0 %v1094
    %1848 = vmatmul.bf16.gmra.mxu0 %v536
    %v1849 = vpop.f32.mrf.mxu0
    %v1850 = vadd.f32 %v1801, %v1849
    %v1851 = vpop.f32.mrf.mxu0
    %v1852 = vadd.f32 %v1803, %v1851
    %1853 = vmatmul.bf16.gmra.mxu0 %v544
    %v1854 = vpop.f32.mrf.mxu0
    %v1855 = vadd.f32 %v1806, %v1854
    %v1856 = vpop.f32.mrf.mxu0
    %v1857 = vadd.f32 %v1808, %v1856
    %1858 = vmatmul.bf16.gmra.mxu0 %v552
    %v1859 = vpop.f32.mrf.mxu0
    %v1860 = vadd.f32 %v1811, %v1859
    %v1861 = vpop.f32.mrf.mxu0
    %v1862 = vadd.f32 %v1813, %v1861
    %1863 = vmatmul.bf16.gmra.mxu0 %v560
    %v1864 = vpop.f32.mrf.mxu0
    %v1865 = vadd.f32 %v1816, %v1864
    %v1866 = vpop.f32.mrf.mxu0
    %v1867 = vadd.f32 %v1818, %v1866
    %1868 = vmatmul.bf16.gmra.mxu0 %v568
    %v1869 = vpop.f32.mrf.mxu0
    %v1870 = vadd.f32 %v1821, %v1869
    %v1871 = vpop.f32.mrf.mxu0
    %v1872 = vadd.f32 %v1823, %v1871
    %1873 = vmatmul.bf16.gmra.mxu0 %v576
    %v1874 = vpop.f32.mrf.mxu0
    %v1875 = vadd.f32 %v1826, %v1874
    %v1876 = vpop.f32.mrf.mxu0
    %v1877 = vadd.f32 %v1828, %v1876
    %1878 = vmatmul.bf16.gmra.mxu0 %v584
    %v1879 = vpop.f32.mrf.mxu0
    %v1880 = vadd.f32 %v1831, %v1879
    %v1881 = vpop.f32.mrf.mxu0
    %v1882 = vadd.f32 %v1833, %v1881
    %1883 = vmatmul.bf16.gmra.mxu0 %v592
    %v1884 = vpop.f32.mrf.mxu0
    %v1885 = vadd.f32 %v1836, %v1884
    %v1886 = vpop.f32.mrf.mxu0
    %v1887 = vadd.f32 %v1838, %v1886
    %1888 = vdwg.mxu0
    %1889 = vmatpush.bf16.msra.mxu0 %v1124
    %1890 = vmatpush.bf16.msra.mxu0 %v1122
    %1891 = vmatpush.bf16.msra.mxu0 %v1120
    %1892 = vmatpush.bf16.msra.mxu0 %v1118
    %1893 = vmatpush.bf16.msra.mxu0 %v1116
    %1894 = vmatpush.bf16.msra.mxu0 %v1114
    %1895 = vmatpush.bf16.msra.mxu0 %v1112
    %1896 = vmatpush.bf16.msra.mxu0 %v1110
    %1897 = vmatmul.bf16.gmra.mxu0 %v537
    %v1898 = vpop.f32.mrf.mxu0
    %v1899 = vadd.f32 %v1850, %v1898
    %v1900 = vpop.f32.mrf.mxu0
    %v1901 = vadd.f32 %v1852, %v1900
    %1902 = vmatmul.bf16.gmra.mxu0 %v545
    %v1903 = vpop.f32.mrf.mxu0
    %v1904 = vadd.f32 %v1855, %v1903
    %v1905 = vpop.f32.mrf.mxu0
    %v1906 = vadd.f32 %v1857, %v1905
    %1907 = vmatmul.bf16.gmra.mxu0 %v553
    %v1908 = vpop.f32.mrf.mxu0
    %v1909 = vadd.f32 %v1860, %v1908
    %v1910 = vpop.f32.mrf.mxu0
    %v1911 = vadd.f32 %v1862, %v1910
    %1912 = vmatmul.bf16.gmra.mxu0 %v561
    %v1913 = vpop.f32.mrf.mxu0
    %v1914 = vadd.f32 %v1865, %v1913
    %v1915 = vpop.f32.mrf.mxu0
    %v1916 = vadd.f32 %v1867, %v1915
    %1917 = vmatmul.bf16.gmra.mxu0 %v569
    %v1918 = vpop.f32.mrf.mxu0
    %v1919 = vadd.f32 %v1870, %v1918
    %v1920 = vpop.f32.mrf.mxu0
    %v1921 = vadd.f32 %v1872, %v1920
    %1922 = vmatmul.bf16.gmra.mxu0 %v577
    %v1923 = vpop.f32.mrf.mxu0
    %v1924 = vadd.f32 %v1875, %v1923
    %v1925 = vpop.f32.mrf.mxu0
    %v1926 = vadd.f32 %v1877, %v1925
    %1927 = vmatmul.bf16.gmra.mxu0 %v585
    %v1928 = vpop.f32.mrf.mxu0
    %v1929 = vadd.f32 %v1880, %v1928
    %v1930 = vpop.f32.mrf.mxu0
    %v1931 = vadd.f32 %v1882, %v1930
    %1932 = vmatmul.bf16.gmra.mxu0 %v593
    %v1933 = vpop.f32.mrf.mxu0
    %v1934 = vadd.f32 %v1885, %v1933
    %v1935 = vpop.f32.mrf.mxu0
    %v1936 = vadd.f32 %v1887, %v1935
    %1937 = vdwg.mxu0
    %1938 = vmatpush.bf16.msra.mxu0 %v1140
    %1939 = vmatpush.bf16.msra.mxu0 %v1138
    %1940 = vmatpush.bf16.msra.mxu0 %v1136
    %1941 = vmatpush.bf16.msra.mxu0 %v1134
    %1942 = vmatpush.bf16.msra.mxu0 %v1132
    %1943 = vmatpush.bf16.msra.mxu0 %v1130
    %1944 = vmatpush.bf16.msra.mxu0 %v1128
    %1945 = vmatpush.bf16.msra.mxu0 %v1126
    %1946 = vmatmul.bf16.gmra.mxu0 %v538
    %v1947 = vpop.f32.mrf.mxu0
    %v1948 = vadd.f32 %v1899, %v1947
    %v1949 = vpop.f32.mrf.mxu0
    %v1950 = vadd.f32 %v1901, %v1949
    %1951 = vmatmul.bf16.gmra.mxu0 %v546
    %v1952 = vpop.f32.mrf.mxu0
    %v1953 = vadd.f32 %v1904, %v1952
    %v1954 = vpop.f32.mrf.mxu0
    %v1955 = vadd.f32 %v1906, %v1954
    %1956 = vmatmul.bf16.gmra.mxu0 %v554
    %v1957 = vpop.f32.mrf.mxu0
    %v1958 = vadd.f32 %v1909, %v1957
    %v1959 = vpop.f32.mrf.mxu0
    %v1960 = vadd.f32 %v1911, %v1959
    %1961 = vmatmul.bf16.gmra.mxu0 %v562
    %v1962 = vpop.f32.mrf.mxu0
    %v1963 = vadd.f32 %v1914, %v1962
    %v1964 = vpop.f32.mrf.mxu0
    %v1965 = vadd.f32 %v1916, %v1964
    %1966 = vmatmul.bf16.gmra.mxu0 %v570
    %v1967 = vpop.f32.mrf.mxu0
    %v1968 = vadd.f32 %v1919, %v1967
    %v1969 = vpop.f32.mrf.mxu0
    %v1970 = vadd.f32 %v1921, %v1969
    %1971 = vmatmul.bf16.gmra.mxu0 %v578
    %v1972 = vpop.f32.mrf.mxu0
    %v1973 = vadd.f32 %v1924, %v1972
    %v1974 = vpop.f32.mrf.mxu0
    %v1975 = vadd.f32 %v1926, %v1974
    %1976 = vmatmul.bf16.gmra.mxu0 %v586
    %v1977 = vpop.f32.mrf.mxu0
    %v1978 = vadd.f32 %v1929, %v1977
    %v1979 = vpop.f32.mrf.mxu0
    %v1980 = vadd.f32 %v1931, %v1979
    %1981 = vmatmul.bf16.gmra.mxu0 %v594
    %v1982 = vpop.f32.mrf.mxu0
    %v1983 = vadd.f32 %v1934, %v1982
    %v1984 = vpop.f32.mrf.mxu0
    %v1985 = vadd.f32 %v1936, %v1984
    %1986 = vdwg.mxu0
    %1987 = vmatpush.bf16.msra.mxu0 %v1156
    %1988 = vmatpush.bf16.msra.mxu0 %v1154
    %1989 = vmatpush.bf16.msra.mxu0 %v1152
    %1990 = vmatpush.bf16.msra.mxu0 %v1150
    %1991 = vmatpush.bf16.msra.mxu0 %v1148
    %1992 = vmatpush.bf16.msra.mxu0 %v1146
    %1993 = vmatpush.bf16.msra.mxu0 %v1144
    %1994 = vmatpush.bf16.msra.mxu0 %v1142
    %1995 = vmatmul.bf16.gmra.mxu0 %v539
    %v1996 = vpop.f32.mrf.mxu0
    %v1997 = vadd.f32 %v1948, %v1996
    %v1998 = vpop.f32.mrf.mxu0
    %v1999 = vadd.f32 %v1950, %v1998
    %2000 = vmatmul.bf16.gmra.mxu0 %v547
    %v2001 = vpop.f32.mrf.mxu0
    %v2002 = vadd.f32 %v1953, %v2001
    %v2003 = vpop.f32.mrf.mxu0
    %v2004 = vadd.f32 %v1955, %v2003
    %2005 = vmatmul.bf16.gmra.mxu0 %v555
    %v2006 = vpop.f32.mrf.mxu0
    %v2007 = vadd.f32 %v1958, %v2006
    %v2008 = vpop.f32.mrf.mxu0
    %v2009 = vadd.f32 %v1960, %v2008
    %2010 = vmatmul.bf16.gmra.mxu0 %v563
    %v2011 = vpop.f32.mrf.mxu0
    %v2012 = vadd.f32 %v1963, %v2011
    %v2013 = vpop.f32.mrf.mxu0
    %v2014 = vadd.f32 %v1965, %v2013
    %2015 = vmatmul.bf16.gmra.mxu0 %v571
    %v2016 = vpop.f32.mrf.mxu0
    %v2017 = vadd.f32 %v1968, %v2016
    %v2018 = vpop.f32.mrf.mxu0
    %v2019 = vadd.f32 %v1970, %v2018
    %2020 = vmatmul.bf16.gmra.mxu0 %v579
    %v2021 = vpop.f32.mrf.mxu0
    %v2022 = vadd.f32 %v1973, %v2021
    %v2023 = vpop.f32.mrf.mxu0
    %v2024 = vadd.f32 %v1975, %v2023
    %2025 = vmatmul.bf16.gmra.mxu0 %v587
    %v2026 = vpop.f32.mrf.mxu0
    %v2027 = vadd.f32 %v1978, %v2026
    %v2028 = vpop.f32.mrf.mxu0
    %v2029 = vadd.f32 %v1980, %v2028
    %2030 = vmatmul.bf16.gmra.mxu0 %v595
    %v2031 = vpop.f32.mrf.mxu0
    %v2032 = vadd.f32 %v1983, %v2031
    %v2033 = vpop.f32.mrf.mxu0
    %v2034 = vadd.f32 %v1985, %v2033
    %2035 = vdwg.mxu0
    %2036 = vmatpush.bf16.msra.mxu0 %v1172
    %2037 = vmatpush.bf16.msra.mxu0 %v1170
    %2038 = vmatpush.bf16.msra.mxu0 %v1168
    %2039 = vmatpush.bf16.msra.mxu0 %v1166
    %2040 = vmatpush.bf16.msra.mxu0 %v1164
    %2041 = vmatpush.bf16.msra.mxu0 %v1162
    %2042 = vmatpush.bf16.msra.mxu0 %v1160
    %2043 = vmatpush.bf16.msra.mxu0 %v1158
    %2044 = vmatmul.bf16.gmra.mxu0 %v540
    %v2045 = vpop.f32.mrf.mxu0
    %v2046 = vadd.f32 %v1997, %v2045
    %v2047 = vpop.f32.mrf.mxu0
    %v2048 = vadd.f32 %v1999, %v2047
    %2049 = vmatmul.bf16.gmra.mxu0 %v548
    %v2050 = vpop.f32.mrf.mxu0
    %v2051 = vadd.f32 %v2002, %v2050
    %v2052 = vpop.f32.mrf.mxu0
    %v2053 = vadd.f32 %v2004, %v2052
    %2054 = vmatmul.bf16.gmra.mxu0 %v556
    %v2055 = vpop.f32.mrf.mxu0
    %v2056 = vadd.f32 %v2007, %v2055
    %v2057 = vpop.f32.mrf.mxu0
    %v2058 = vadd.f32 %v2009, %v2057
    %2059 = vmatmul.bf16.gmra.mxu0 %v564
    %v2060 = vpop.f32.mrf.mxu0
    %v2061 = vadd.f32 %v2012, %v2060
    %v2062 = vpop.f32.mrf.mxu0
    %v2063 = vadd.f32 %v2014, %v2062
    %2064 = vmatmul.bf16.gmra.mxu0 %v572
    %v2065 = vpop.f32.mrf.mxu0
    %v2066 = vadd.f32 %v2017, %v2065
    %v2067 = vpop.f32.mrf.mxu0
    %v2068 = vadd.f32 %v2019, %v2067
    %2069 = vmatmul.bf16.gmra.mxu0 %v580
    %v2070 = vpop.f32.mrf.mxu0
    %v2071 = vadd.f32 %v2022, %v2070
    %v2072 = vpop.f32.mrf.mxu0
    %v2073 = vadd.f32 %v2024, %v2072
    %2074 = vmatmul.bf16.gmra.mxu0 %v588
    %v2075 = vpop.f32.mrf.mxu0
    %v2076 = vadd.f32 %v2027, %v2075
    %v2077 = vpop.f32.mrf.mxu0
    %v2078 = vadd.f32 %v2029, %v2077
    %2079 = vmatmul.bf16.gmra.mxu0 %v596
    %v2080 = vpop.f32.mrf.mxu0
    %v2081 = vadd.f32 %v2032, %v2080
    %v2082 = vpop.f32.mrf.mxu0
    %v2083 = vadd.f32 %v2034, %v2082
    %2084 = vdwg.mxu0
    %v2085 = vmax.f32 %v1654, 0.0
    %v2086 = vmax.f32 %v2046, 0.0
    %v2087 = vmax.f32 %v1656, 0.0
    %v2088 = vmax.f32 %v2048, 0.0
    %v2089 = vmax.f32 %v1659, 0.0
    %v2090 = vmax.f32 %v2051, 0.0
    %v2091 = vmax.f32 %v1661, 0.0
    %v2092 = vmax.f32 %v2053, 0.0
    %v2093 = vmax.f32 %v1664, 0.0
    %v2094 = vmax.f32 %v2056, 0.0
    %v2095 = vmax.f32 %v1666, 0.0
    %v2096 = vmax.f32 %v2058, 0.0
    %v2097 = vmax.f32 %v1669, 0.0
    %v2098 = vmax.f32 %v2061, 0.0
    %v2099 = vmax.f32 %v1671, 0.0
    %v2100 = vmax.f32 %v2063, 0.0
    %v2101 = vmax.f32 %v1674, 0.0
    %v2102 = vmax.f32 %v2066, 0.0
    %v2103 = vmax.f32 %v1676, 0.0
    %v2104 = vmax.f32 %v2068, 0.0
    %v2105 = vmax.f32 %v1679, 0.0
    %v2106 = vmax.f32 %v2071, 0.0
    %v2107 = vmax.f32 %v1681, 0.0
    %v2108 = vmax.f32 %v2073, 0.0
    %v2109 = vmax.f32 %v1684, 0.0
    %v2110 = vmax.f32 %v2076, 0.0
    %v2111 = vmax.f32 %v1686, 0.0
    %v2112 = vmax.f32 %v2078, 0.0
    %v2113 = vmax.f32 %v1689, 0.0
    %v2114 = vmax.f32 %v2081, 0.0
    %v2115 = vmax.f32 %v1691, 0.0
    %v2116 = vmax.f32 %v2083, 0.0
    %v2117 = vpack.c.bf16 %v2087, %v2085
    %v2118 = vpack.c.bf16 %v2088, %v2086
    %v2119 = vpack.c.bf16 %v2091, %v2089
    %v2120 = vpack.c.bf16 %v2092, %v2090
    %v2121 = vpack.c.bf16 %v2095, %v2093
    %v2122 = vpack.c.bf16 %v2096, %v2094
    %v2123 = vpack.c.bf16 %v2099, %v2097
    %v2124 = vpack.c.bf16 %v2100, %v2098
    %v2125 = vpack.c.bf16 %v2103, %v2101
    %v2126 = vpack.c.bf16 %v2104, %v2102
    %v2127 = vpack.c.bf16 %v2107, %v2105
    %v2128 = vpack.c.bf16 %v2108, %v2106
    %v2129 = vpack.c.bf16 %v2111, %v2109
    %v2130 = vpack.c.bf16 %v2112, %v2110
    %v2131 = vpack.c.bf16 %v2115, %v2113
    %v2132 = vpack.c.bf16 %v2116, %v2114
    %v2133 = vld [vmem:[%s3] sm:$0xf]
    %v2134 = vld [vmem:[%s3 + $0x4] sm:$0xf]
    %v2135 = vld [vmem:[%s3 + $0x8] sm:$0xf]
    %v2136 = vld [vmem:[%s3 + $0xc] sm:$0xf]
    %v2137 = vld [vmem:[%s3 + $0x10] sm:$0xf]
    %v2138 = vld [vmem:[%s3 + $0x14] sm:$0xf]
    %v2139 = vld [vmem:[%s3 + $0x18] sm:$0xf]
    %v2140 = vld [vmem:[%s3 + $0x1c] sm:$0xf]
    %v2141 = vld [vmem:[%s3 + $0x20] sm:$0xf]
    %v2142 = vld [vmem:[%s3 + $0x24] sm:$0xf]
    %v2143 = vld [vmem:[%s3 + $0x28] sm:$0xf]
    %v2144 = vld [vmem:[%s3 + $0x2c] sm:$0xf]
    %v2145 = vld [vmem:[%s3 + $0x30] sm:$0xf]
    %v2146 = vld [vmem:[%s3 + $0x34] sm:$0xf]
    %v2147 = vld [vmem:[%s3 + $0x38] sm:$0xf]
    %v2148 = vld [vmem:[%s3 + $0x3c] sm:$0xf]
    %v2149 = vld [vmem:[%s4] sm:$0xff]
    %v2150 = vld [vmem:[%s4 + $0x8] sm:$0xff]
    %v2151 = vld [vmem:[%s4 + $0x10] sm:$0xff]
    %v2152 = vld [vmem:[%s4 + $0x18] sm:$0xff]
    %v2153 = vld [vmem:[%s4 + $0x20] sm:$0xff]
    %v2154 = vld [vmem:[%s4 + $0x28] sm:$0xff]
    %v2155 = vld [vmem:[%s4 + $0x30] sm:$0xff]
    %v2156 = vld [vmem:[%s4 + $0x38] sm:$0xff]
    %v2157 = vld [vmem:[%s4 + $0x40] sm:$0xff]
    %v2158 = vld [vmem:[%s4 + $0x48] sm:$0xff]
    %v2159 = vld [vmem:[%s4 + $0x50] sm:$0xff]
    %v2160 = vld [vmem:[%s4 + $0x58] sm:$0xff]
    %v2161 = vld [vmem:[%s4 + $0x60] sm:$0xff]
    %v2162 = vld [vmem:[%s4 + $0x68] sm:$0xff]
    %v2163 = vld [vmem:[%s4 + $0x70] sm:$0xff]
    %v2164 = vld [vmem:[%s4 + $0x78] sm:$0xff]
    %2166 = vset.pattern.permute.xlu0 0
    %2167 = vperm.xlu0 %2166, %v2149
    %v2168 = vpop.permute.xlu0 %2167
    %2171 = vset.pattern.permute.xlu0 0
    %2172 = vperm.xlu0 %2171, %v2150
    %v2173 = vpop.permute.xlu0 %2172
    %2176 = vset.pattern.permute.xlu0 0
    %2177 = vperm.xlu0 %2176, %v2151
    %v2178 = vpop.permute.xlu0 %2177
    %2181 = vset.pattern.permute.xlu0 0
    %2182 = vperm.xlu0 %2181, %v2152
    %v2183 = vpop.permute.xlu0 %2182
    %2186 = vset.pattern.permute.xlu0 0
    %2187 = vperm.xlu0 %2186, %v2153
    %v2188 = vpop.permute.xlu0 %2187
    %2191 = vset.pattern.permute.xlu0 0
    %2192 = vperm.xlu0 %2191, %v2154
    %v2193 = vpop.permute.xlu0 %2192
    %2196 = vset.pattern.permute.xlu0 0
    %2197 = vperm.xlu0 %2196, %v2155
    %v2198 = vpop.permute.xlu0 %2197
    %2201 = vset.pattern.permute.xlu0 0
    %2202 = vperm.xlu0 %2201, %v2156
    %v2203 = vpop.permute.xlu0 %2202
    %2206 = vset.pattern.permute.xlu0 0
    %2207 = vperm.xlu0 %2206, %v2157
    %v2208 = vpop.permute.xlu0 %2207
    %2211 = vset.pattern.permute.xlu0 0
    %2212 = vperm.xlu0 %2211, %v2158
    %v2213 = vpop.permute.xlu0 %2212
    %2216 = vset.pattern.permute.xlu0 0
    %2217 = vperm.xlu0 %2216, %v2159
    %v2218 = vpop.permute.xlu0 %2217
    %2221 = vset.pattern.permute.xlu0 0
    %2222 = vperm.xlu0 %2221, %v2160
    %v2223 = vpop.permute.xlu0 %2222
    %2226 = vset.pattern.permute.xlu0 0
    %2227 = vperm.xlu0 %2226, %v2161
    %v2228 = vpop.permute.xlu0 %2227
    %2231 = vset.pattern.permute.xlu0 0
    %2232 = vperm.xlu0 %2231, %v2162
    %v2233 = vpop.permute.xlu0 %2232
    %2236 = vset.pattern.permute.xlu0 0
    %2237 = vperm.xlu0 %2236, %v2163
    %v2238 = vpop.permute.xlu0 %2237
    %2241 = vset.pattern.permute.xlu0 0
    %2242 = vperm.xlu0 %2241, %v2164
    %v2243 = vpop.permute.xlu0 %2242
    %v2261 = vunpack.c.l.b16 %v2133
    %v2262 = vunpack.c.l.b16 %v2134
    %v2263 = vunpack.c.l.b16 %v2135
    %v2264 = vunpack.c.l.b16 %v2136
    %v2265 = vunpack.c.l.b16 %v2137
    %v2266 = vunpack.c.l.b16 %v2138
    %v2267 = vunpack.c.l.b16 %v2139
    %v2268 = vunpack.c.l.b16 %v2140
    %v2269 = vunpack.c.l.b16 %v2141
    %v2270 = vunpack.c.l.b16 %v2142
    %v2271 = vunpack.c.l.b16 %v2143
    %v2272 = vunpack.c.l.b16 %v2144
    %v2273 = vunpack.c.l.b16 %v2145
    %v2274 = vunpack.c.l.b16 %v2146
    %v2275 = vunpack.c.l.b16 %v2147
    %v2276 = vunpack.c.l.b16 %v2148
    %v2277 = vpack.c.b16 %v2262, %v2261
    %v2278 = vpack.c.b16 %v2264, %v2263
    %v2279 = vpack.c.b16 %v2266, %v2265
    %v2280 = vpack.c.b16 %v2268, %v2267
    %v2281 = vpack.c.b16 %v2270, %v2269
    %v2282 = vpack.c.b16 %v2272, %v2271
    %v2283 = vpack.c.b16 %v2274, %v2273
    %v2284 = vpack.c.b16 %v2276, %v2275
    %2293 = vmatpush.bf16.msra.mxu0 %v2131
    %2294 = vmatpush.bf16.msra.mxu0 %v2129
    %2295 = vmatpush.bf16.msra.mxu0 %v2127
    %2296 = vmatpush.bf16.msra.mxu0 %v2125
    %2297 = vmatpush.bf16.msra.mxu0 %v2123
    %2298 = vmatpush.bf16.msra.mxu0 %v2121
    %2299 = vmatpush.bf16.msra.mxu0 %v2119
    %2300 = vmatpush.bf16.msra.mxu0 %v2117
    %2301 = vmatmul.bf16.gmra.mxu0 %v2277
    %v2302 = vpop.f32.mrf.mxu0
    %v2303 = vadd.f32 %v2168, %v2302
    %v2304 = vpop.f32.mrf.mxu0
    %v2305 = vadd.f32 %v2173, %v2304
    %2306 = vmatmul.bf16.gmra.mxu0 %v2278
    %v2307 = vpop.f32.mrf.mxu0
    %v2308 = vadd.f32 %v2178, %v2307
    %v2309 = vpop.f32.mrf.mxu0
    %v2310 = vadd.f32 %v2183, %v2309
    %2311 = vmatmul.bf16.gmra.mxu0 %v2279
    %v2312 = vpop.f32.mrf.mxu0
    %v2313 = vadd.f32 %v2188, %v2312
    %v2314 = vpop.f32.mrf.mxu0
    %v2315 = vadd.f32 %v2193, %v2314
    %2316 = vmatmul.bf16.gmra.mxu0 %v2280
    %v2317 = vpop.f32.mrf.mxu0
    %v2318 = vadd.f32 %v2198, %v2317
    %v2319 = vpop.f32.mrf.mxu0
    %v2320 = vadd.f32 %v2203, %v2319
    %2321 = vmatmul.bf16.gmra.mxu0 %v2281
    %v2322 = vpop.f32.mrf.mxu0
    %v2323 = vadd.f32 %v2208, %v2322
    %v2324 = vpop.f32.mrf.mxu0
    %v2325 = vadd.f32 %v2213, %v2324
    %2326 = vmatmul.bf16.gmra.mxu0 %v2282
    %v2327 = vpop.f32.mrf.mxu0
    %v2328 = vadd.f32 %v2218, %v2327
    %v2329 = vpop.f32.mrf.mxu0
    %v2330 = vadd.f32 %v2223, %v2329
    %2331 = vmatmul.bf16.gmra.mxu0 %v2283
    %v2332 = vpop.f32.mrf.mxu0
    %v2333 = vadd.f32 %v2228, %v2332
    %v2334 = vpop.f32.mrf.mxu0
    %v2335 = vadd.f32 %v2233, %v2334
    %2336 = vmatmul.bf16.gmra.mxu0 %v2284
    %v2337 = vpop.f32.mrf.mxu0
    %v2338 = vadd.f32 %v2238, %v2337
    %v2339 = vpop.f32.mrf.mxu0
    %v2340 = vadd.f32 %v2243, %v2339
    %2341 = vdwg.mxu0
    %2342 = vmatpush.bf16.msra.mxu0 %v2132
    %2343 = vmatpush.bf16.msra.mxu0 %v2130
    %2344 = vmatpush.bf16.msra.mxu0 %v2128
    %2345 = vmatpush.bf16.msra.mxu0 %v2126
    %2346 = vmatpush.bf16.msra.mxu0 %v2124
    %2347 = vmatpush.bf16.msra.mxu0 %v2122
    %2348 = vmatpush.bf16.msra.mxu0 %v2120
    %2349 = vmatpush.bf16.msra.mxu0 %v2118
    %2350 = vmatmul.bf16.gmra.mxu0 %v2277
    %v2351 = vpop.f32.mrf.mxu0
    %v2352 = vadd.f32 %v2168, %v2351
    %v2353 = vpop.f32.mrf.mxu0
    %v2354 = vadd.f32 %v2173, %v2353
    %2355 = vmatmul.bf16.gmra.mxu0 %v2278
    %v2356 = vpop.f32.mrf.mxu0
    %v2357 = vadd.f32 %v2178, %v2356
    %v2358 = vpop.f32.mrf.mxu0
    %v2359 = vadd.f32 %v2183, %v2358
    %2360 = vmatmul.bf16.gmra.mxu0 %v2279
    %v2361 = vpop.f32.mrf.mxu0
    %v2362 = vadd.f32 %v2188, %v2361
    %v2363 = vpop.f32.mrf.mxu0
    %v2364 = vadd.f32 %v2193, %v2363
    %2365 = vmatmul.bf16.gmra.mxu0 %v2280
    %v2366 = vpop.f32.mrf.mxu0
    %v2367 = vadd.f32 %v2198, %v2366
    %v2368 = vpop.f32.mrf.mxu0
    %v2369 = vadd.f32 %v2203, %v2368
    %2370 = vmatmul.bf16.gmra.mxu0 %v2281
    %v2371 = vpop.f32.mrf.mxu0
    %v2372 = vadd.f32 %v2208, %v2371
    %v2373 = vpop.f32.mrf.mxu0
    %v2374 = vadd.f32 %v2213, %v2373
    %2375 = vmatmul.bf16.gmra.mxu0 %v2282
    %v2376 = vpop.f32.mrf.mxu0
    %v2377 = vadd.f32 %v2218, %v2376
    %v2378 = vpop.f32.mrf.mxu0
    %v2379 = vadd.f32 %v2223, %v2378
    %2380 = vmatmul.bf16.gmra.mxu0 %v2283
    %v2381 = vpop.f32.mrf.mxu0
    %v2382 = vadd.f32 %v2228, %v2381
    %v2383 = vpop.f32.mrf.mxu0
    %v2384 = vadd.f32 %v2233, %v2383
    %2385 = vmatmul.bf16.gmra.mxu0 %v2284
    %v2386 = vpop.f32.mrf.mxu0
    %v2387 = vadd.f32 %v2238, %v2386
    %v2388 = vpop.f32.mrf.mxu0
    %v2389 = vadd.f32 %v2243, %v2388
    %2390 = vdwg.mxu0
    %v2391 = vpack.c.bf16 %v2352, %v2303
    %v2392 = vpack.c.bf16 %v2354, %v2305
    %v2393 = vpack.c.bf16 %v2357, %v2308
    %v2394 = vpack.c.bf16 %v2359, %v2310
    %v2395 = vpack.c.bf16 %v2362, %v2313
    %v2396 = vpack.c.bf16 %v2364, %v2315
    %v2397 = vpack.c.bf16 %v2367, %v2318
    %v2398 = vpack.c.bf16 %v2369, %v2320
    %v2399 = vpack.c.bf16 %v2372, %v2323
    %v2400 = vpack.c.bf16 %v2374, %v2325
    %v2401 = vpack.c.bf16 %v2377, %v2328
    %v2402 = vpack.c.bf16 %v2379, %v2330
    %v2403 = vpack.c.bf16 %v2382, %v2333
    %v2404 = vpack.c.bf16 %v2384, %v2335
    %v2405 = vpack.c.bf16 %v2387, %v2338
    %v2406 = vpack.c.bf16 %v2389, %v2340
    %2407 = vst [vmem:[#allocation7] sm:$0xff] %v2391
    %2408 = vst [vmem:[#allocation7 + $0x8] sm:$0xff] %v2392
    %2409 = vst [vmem:[#allocation7 + $0x10] sm:$0xff] %v2393
    %2410 = vst [vmem:[#allocation7 + $0x18] sm:$0xff] %v2394
    %2411 = vst [vmem:[#allocation7 + $0x20] sm:$0xff] %v2395
    %2412 = vst [vmem:[#allocation7 + $0x28] sm:$0xff] %v2396
    %2413 = vst [vmem:[#allocation7 + $0x30] sm:$0xff] %v2397
    %2414 = vst [vmem:[#allocation7 + $0x38] sm:$0xff] %v2398
    %2415 = vst [vmem:[#allocation7 + $0x40] sm:$0xff] %v2399
    %2416 = vst [vmem:[#allocation7 + $0x48] sm:$0xff] %v2400
    %2417 = vst [vmem:[#allocation7 + $0x50] sm:$0xff] %v2401
    %2418 = vst [vmem:[#allocation7 + $0x58] sm:$0xff] %v2402
    %2419 = vst [vmem:[#allocation7 + $0x60] sm:$0xff] %v2403
    %2420 = vst [vmem:[#allocation7 + $0x68] sm:$0xff] %v2404
    %2421 = vst [vmem:[#allocation7 + $0x70] sm:$0xff] %v2405
    %2422 = vst [vmem:[#allocation7 + $0x78] sm:$0xff] %v2406
    // Predicated region
    $region30: #{tpu_custom_call.1} parent=1 // pred_check
      _
    $region31: #{tpu_custom_call.1} parent=1 // pred_check_branch
      %2424 = sbr.rel (0) target = $region33
    $region32: #{tpu_custom_call.1} parent=1 // pred_region
      %2426 = vsyncadd [#allocation4], 0
      %s2427 = sshll.u32 [#allocation7], 4
      %s2428 = int_to_ptr.vmem [resolvable:$true] %s2427
      %s2429 = sshll.u32 %s5, 4
      %s2430 = int_to_ptr.hbm [resolvable:$true] %s2429
      %2435 = dma.vmem_to_hbm [thread:$0]  %s2428, 2048, %s2430, [#allocation4], 128, 128, 8
    $region33: #{tpu_custom_call.1} parent=1 // pred_fallthru
      _
    // Predicated region
    $region34: #{tpu_custom_call.1} parent=1 // pred_check
      _
    $region35: #{tpu_custom_call.1} parent=1 // pred_check_branch
      %2437 = sbr.rel (0) target = $region37
    $region36: #{tpu_custom_call.1} parent=1 // pred_region
      %2439 = dma.done [#allocation4], 2048
    $region37: #{tpu_custom_call.1} parent=1 // pred_fallthru
      _
    %2440 = vsyncpa [#allocation3], 1
    %2441 = vsyncpa [#allocation6], 1
    %2442 = vsyncpa [#allocation4], 1

</llo_original>
